<compile_context>
chip_gen: v7x
topology: tpu7x:2x2x1
jax: 0.10.0
libtpu: 0.0.40
codegen_flags: <defaults>
</compile_context>

<pallas_src>
import jax
import jax.numpy as jnp
from jax.experimental import pallas as pl
from jax.experimental.pallas import tpu as pltpu


def _round_up(n, m):
    return ((n + m - 1) // m) * m


def _make_disc_kernel(output_dims, out_pad):
    """Fused 3-layer MLP + masked log-softmax for one batch tile."""

    def kernel(x_ref, w1_ref, b1_ref, w2_ref, b2_ref, w3_ref, b3_ref, o_ref):
        x = x_ref[...]  # already f32; no redundant astype pass

        # Layer 1: Linear + ReLU (MXU, f32 accumulation)
        h1 = jnp.dot(x, w1_ref[...], preferred_element_type=jnp.float32) + b1_ref[...]
        h1 = jnp.maximum(h1, 0.0)

        # Layer 2: Linear + ReLU
        h2 = jnp.dot(h1, w2_ref[...], preferred_element_type=jnp.float32) + b2_ref[...]
        h2 = jnp.maximum(h2, 0.0)

        # Layer 3: Linear (logits), output lanes padded to `out_pad` (128-multiple)
        logits = jnp.dot(h2, w3_ref[...], preferred_element_type=jnp.float32) + b3_ref[...]

        if out_pad != output_dims:
            # Mask the zero-padded columns out of the softmax normalizer.
            col = jax.lax.broadcasted_iota(jnp.int32, logits.shape, 1)
            logits = jnp.where(col < output_dims, logits, jnp.float32(-1e30))

        # Numerically stable log-softmax over the (masked) feature dim.
        m = jnp.max(logits, axis=-1, keepdims=True)
        z = logits - m
        lse = jnp.log(jnp.sum(jnp.exp(z), axis=-1, keepdims=True))
        o_ref[...] = (z - lse).astype(o_ref.dtype)

    return kernel


def adda_discriminator_forward(x, params, *, batch_tile=None):
    """x: (B, input_dims) float32.  params: dict of w1,b1,w2,b2,w3,b3."""
    B, input_dims = x.shape
    hidden_dims = params["w1"].shape[1]
    output_dims = params["w3"].shape[1]

    # --- choose a batch tile: big, MXU-aligned, and >= 2 grid steps on big B ---
    if batch_tile is None:
        if B >= 512:
            batch_tile = 256                                 # multiple of 128, >=2 steps
        elif B > 128:
            batch_tile = _round_up(pl.cdiv(B, 2), 128)       # 2 steps (v7x: one per TC)
        else:
            batch_tile = _round_up(B, 8)                     # whole small batch, one step

    Bp = _round_up(B, batch_tile)
    if Bp != B:
        x = jnp.pad(x, ((0, Bp - B), (0, 0)))                # zero rows, sliced off below

    # --- lane-dense output: pad the 2-wide logits to 128 lanes ---
    out_pad = _round_up(output_dims, 128)

    w1, b1 = params["w1"], params["b1"].reshape(1, hidden_dims)
    w2, b2 = params["w2"], params["b2"].reshape(1, hidden_dims)
    w3, b3 = params["w3"], params["b3"].reshape(1, output_dims)
    if out_pad != output_dims:
        w3 = jnp.pad(w3, ((0, 0), (0, out_pad - output_dims)))
        b3 = jnp.pad(b3, ((0, 0), (0, out_pad - output_dims)))

    grid = (Bp // batch_tile,)

    def const(shape):
        # Whole-array block, revisited (same block) on every grid step.
        # TODO(synk): pin to pipeline_mode=pl.Buffered(1) if hidden_dims is scaled up,
        # to halve resident weight VMEM (negligible at these shapes).
        return pl.BlockSpec(shape, lambda i: (0, 0))

    out = pl.pallas_call(
        _make_disc_kernel(output_dims, out_pad),
        out_shape=jax.ShapeDtypeStruct((Bp, out_pad), jnp.float32),
        grid=grid,
        in_specs=[
            pl.BlockSpec((batch_tile, input_dims), lambda i: (i, 0)),  # x tile
            const((input_dims, hidden_dims)),   # w1
            const((1, hidden_dims)),            # b1
            const((hidden_dims, hidden_dims)),  # w2
            const((1, hidden_dims)),            # b2
            const((hidden_dims, out_pad)),      # w3 (lane-padded)
            const((1, out_pad)),                # b3 (lane-padded)
        ],
        out_specs=pl.BlockSpec((batch_tile, out_pad), lambda i: (i, 0)),
        compiler_params=pltpu.CompilerParams(
            dimension_semantics=("parallel",),
        ),
    )(x, w1, b1, w2, b2, w3, b3)

    return out[:B, :output_dims]


def init_params(key, input_dims, hidden_dims, output_dims):
    """Deterministic synthetic parameters (shapes match nn.Linear layers)."""
    k1, k2, k3, k4, k5, k6 = jax.random.split(key, 6)
    scale1 = 1.0 / jnp.sqrt(input_dims)
    scale2 = 1.0 / jnp.sqrt(hidden_dims)
    return {
        # stored as (in, out) == transpose of PyTorch's (out, in)
        "w1": jax.random.uniform(k1, (input_dims, hidden_dims), jnp.float32, -scale1, scale1),
        "b1": jax.random.uniform(k2, (hidden_dims,), jnp.float32, -scale1, scale1),
        "w2": jax.random.uniform(k3, (hidden_dims, hidden_dims), jnp.float32, -scale2, scale2),
        "b2": jax.random.uniform(k4, (hidden_dims,), jnp.float32, -scale2, scale2),
        "w3": jax.random.uniform(k5, (hidden_dims, output_dims), jnp.float32, -scale2, scale2),
        "b3": jax.random.uniform(k6, (output_dims,), jnp.float32, -scale2, scale2),
    }


def reference_forward(x, params):
    """Plain-JAX reference mirroring the PyTorch module."""
    h1 = jnp.maximum(x @ params["w1"] + params["b1"], 0.0)
    h2 = jnp.maximum(h1 @ params["w2"] + params["b2"], 0.0)
    logits = h2 @ params["w3"] + params["b3"]
    return jax.nn.log_softmax(logits, axis=-1)


if __name__ == "__main__":
    key = jax.random.PRNGKey(0)
    kx_big, kx_small, kp = jax.random.split(key, 3)

    # ADDA-style discriminator shapes: feature embedding -> 2-way domain logit.
    input_dims, hidden_dims, output_dims = 64, 32, 2
    params = init_params(kp, input_dims, hidden_dims, output_dims)

    # Larger batch: exercises 256-row MXU-aligned tiles and a 2-step
    # "parallel" grid (sharded across both TensorCores on v7x).
    x_big = jax.random.normal(kx_big, (512, input_dims), dtype=jnp.float32)
    out_big = jax.block_until_ready(adda_discriminator_forward(x_big, params))
    ref_big = reference_forward(x_big, params)
    assert out_big.shape == (512, output_dims)
    assert jnp.allclose(out_big, ref_big, atol=1e-4, rtol=1e-4), "mismatch (big batch)"

    # Small ragged batch: exercises wrapper-side padding + slicing.
    x_small = jax.random.normal(kx_small, (10, input_dims), dtype=jnp.float32)
    out_small = jax.block_until_ready(adda_discriminator_forward(x_small, params))
    ref_small = reference_forward(x_small, params)
    assert out_small.shape == (10, output_dims)
    assert jnp.allclose(out_small, ref_small, atol=1e-4, rtol=1e-4), "mismatch (small batch)"

    print("KERNEL_OK")
</pallas_src>

<mosaic_0001>
module attributes {stable_mosaic.version = 11 : i64} {
  func.func @kernel(%arg0: i32, %arg1: memref<256x64xf32, #tpu.memory_space<vmem>>, %arg2: memref<64x32xf32, #tpu.memory_space<vmem>>, %arg3: memref<1x32xf32, #tpu.memory_space<vmem>>, %arg4: memref<32x32xf32, #tpu.memory_space<vmem>>, %arg5: memref<1x32xf32, #tpu.memory_space<vmem>>, %arg6: memref<32x128xf32, #tpu.memory_space<vmem>>, %arg7: memref<1x128xf32, #tpu.memory_space<vmem>>, %arg8: memref<256x128xf32, #tpu.memory_space<vmem>>) attributes {dimension_semantics = [#tpu.dimension_semantics<parallel>], iteration_bounds = array<i64: 2>, scalar_prefetch = 0 : i64, scratch_operands = 0 : i64, tpu.core_type = #tpu.core_type<tc>, window_params = [{transform_indices = @transform_0, window_bounds = array<i64: 256, 64>}, {pipeline_mode = #tpu.pipeline_mode<synchronous>, transform_indices = @transform_1, window_bounds = array<i64: 64, 32>}, {pipeline_mode = #tpu.pipeline_mode<synchronous>, transform_indices = @transform_2, window_bounds = array<i64: 1, 32>}, {pipeline_mode = #tpu.pipeline_mode<synchronous>, transform_indices = @transform_3, window_bounds = array<i64: 32, 32>}, {pipeline_mode = #tpu.pipeline_mode<synchronous>, transform_indices = @transform_4, window_bounds = array<i64: 1, 32>}, {pipeline_mode = #tpu.pipeline_mode<synchronous>, transform_indices = @transform_5, window_bounds = array<i64: 32, 128>}, {pipeline_mode = #tpu.pipeline_mode<synchronous>, transform_indices = @transform_6, window_bounds = array<i64: 1, 128>}, {transform_indices = @transform_7, window_bounds = array<i64: 256, 128>}]} {
    %c0 = arith.constant 0 : index
    %c0_0 = arith.constant 0 : index
    %0 = vector.load %arg1[%c0, %c0_0] : memref<256x64xf32, #tpu.memory_space<vmem>>, vector<256x64xf32>
    %c0_1 = arith.constant 0 : index
    %c0_2 = arith.constant 0 : index
    %1 = vector.load %arg2[%c0_1, %c0_2] : memref<64x32xf32, #tpu.memory_space<vmem>>, vector<64x32xf32>
    %cst = arith.constant dense<0.000000e+00> : vector<256x32xf32>
    %2 = tpu.matmul %0, %1, %cst {dimension_numbers = #tpu.dot_dimension_numbers<[1], [0], [0], [1], [0, 0, 1, 1], [], []>} : vector<256x64xf32>, vector<64x32xf32>, vector<256x32xf32> -> vector<256x32xf32>
    %c0_3 = arith.constant 0 : index
    %c0_4 = arith.constant 0 : index
    %3 = vector.load %arg3[%c0_3, %c0_4] : memref<1x32xf32, #tpu.memory_space<vmem>>, vector<1x32xf32>
    %4 = vector.broadcast %3 : vector<1x32xf32> to vector<256x32xf32>
    %5 = arith.addf %2, %4 : vector<256x32xf32>
    %cst_5 = arith.constant 0.000000e+00 : f32
    %6 = vector.broadcast %cst_5 : f32 to vector<256x32xf32>
    %7 = arith.maximumf %5, %6 : vector<256x32xf32>
    %c0_6 = arith.constant 0 : index
    %c0_7 = arith.constant 0 : index
    %8 = vector.load %arg4[%c0_6, %c0_7] : memref<32x32xf32, #tpu.memory_space<vmem>>, vector<32x32xf32>
    %cst_8 = arith.constant dense<0.000000e+00> : vector<256x32xf32>
    %9 = tpu.matmul %7, %8, %cst_8 {dimension_numbers = #tpu.dot_dimension_numbers<[1], [0], [0], [1], [0, 0, 1, 1], [], []>} : vector<256x32xf32>, vector<32x32xf32>, vector<256x32xf32> -> vector<256x32xf32>
    %c0_9 = arith.constant 0 : index
    %c0_10 = arith.constant 0 : index
    %10 = vector.load %arg5[%c0_9, %c0_10] : memref<1x32xf32, #tpu.memory_space<vmem>>, vector<1x32xf32>
    %11 = vector.broadcast %10 : vector<1x32xf32> to vector<256x32xf32>
    %12 = arith.addf %9, %11 : vector<256x32xf32>
    %cst_11 = arith.constant 0.000000e+00 : f32
    %13 = vector.broadcast %cst_11 : f32 to vector<256x32xf32>
    %14 = arith.maximumf %12, %13 : vector<256x32xf32>
    %c0_12 = arith.constant 0 : index
    %c0_13 = arith.constant 0 : index
    %15 = vector.load %arg6[%c0_12, %c0_13] : memref<32x128xf32, #tpu.memory_space<vmem>>, vector<32x128xf32>
    %cst_14 = arith.constant dense<0.000000e+00> : vector<256x128xf32>
    %16 = tpu.matmul %14, %15, %cst_14 {dimension_numbers = #tpu.dot_dimension_numbers<[1], [0], [0], [1], [0, 0, 1, 1], [], []>} : vector<256x32xf32>, vector<32x128xf32>, vector<256x128xf32> -> vector<256x128xf32>
    %c0_15 = arith.constant 0 : index
    %c0_16 = arith.constant 0 : index
    %17 = vector.load %arg7[%c0_15, %c0_16] : memref<1x128xf32, #tpu.memory_space<vmem>>, vector<1x128xf32>
    %18 = vector.broadcast %17 : vector<1x128xf32> to vector<256x128xf32>
    %19 = arith.addf %16, %18 : vector<256x128xf32>
    %20 = tpu.iota {dimensions = array<i32: 1>} : vector<256x128xi32>
    %c2_i32 = arith.constant 2 : i32
    %21 = vector.broadcast %c2_i32 : i32 to vector<256x128xi32>
    %22 = arith.cmpi slt, %20, %21 : vector<256x128xi32>
    %cst_17 = arith.constant -1.000000e+30 : f32
    %23 = vector.broadcast %cst_17 : f32 to vector<256x128xf32>
    %24 = arith.select %22, %19, %23 : vector<256x128xi1>, vector<256x128xf32>
    %cst_18 = arith.constant dense<0xFF800000> : vector<256xf32>
    %25 = vector.multi_reduction <maximumf>, %24, %cst_18 [1] : vector<256x128xf32> to vector<256xf32>
    %26 = vector.shape_cast %25 : vector<256xf32> to vector<256x1xf32>
    %27 = vector.broadcast %26 : vector<256x1xf32> to vector<256x128xf32>
    %28 = arith.subf %24, %27 : vector<256x128xf32>
    %29 = math.exp %28 : vector<256x128xf32>
    %cst_19 = arith.constant dense<0.000000e+00> : vector<256xf32>
    %30 = vector.multi_reduction <add>, %29, %cst_19 [1] : vector<256x128xf32> to vector<256xf32>
    %31 = vector.shape_cast %30 : vector<256xf32> to vector<256x1xf32>
    %32 = math.log %31 : vector<256x1xf32>
    %33 = vector.broadcast %32 : vector<256x1xf32> to vector<256x128xf32>
    %34 = arith.subf %28, %33 : vector<256x128xf32>
    %c0_20 = arith.constant 0 : index
    %c0_21 = arith.constant 0 : index
    %35 = vector.load %arg8[%c0_20, %c0_21] : memref<256x128xf32, #tpu.memory_space<vmem>>, vector<256x128xf32>
    tpu.vector_store %arg8[%c0_20, %c0_21], %34 {strides = array<i32>} : memref<256x128xf32, #tpu.memory_space<vmem>>, vector<256x128xf32>,
    return
  }
  func.func @transform_0(%arg0: i32) -> (i32, i32) {
    %c0_i32 = arith.constant 0 : i32
    %c0_i32_0 = arith.constant 0 : i32
    return %arg0, %c0_i32 : i32, i32
  }
  func.func @transform_1(%arg0: i32) -> (i32, i32) {
    %c0_i32 = arith.constant 0 : i32
    %c0_i32_0 = arith.constant 0 : i32
    %c0_i32_1 = arith.constant 0 : i32
    return %c0_i32, %c0_i32_0 : i32, i32
  }
  func.func @transform_2(%arg0: i32) -> (i32, i32) {
    %c0_i32 = arith.constant 0 : i32
    %c0_i32_0 = arith.constant 0 : i32
    %c0_i32_1 = arith.constant 0 : i32
    return %c0_i32, %c0_i32_0 : i32, i32
  }
  func.func @transform_3(%arg0: i32) -> (i32, i32) {
    %c0_i32 = arith.constant 0 : i32
    %c0_i32_0 = arith.constant 0 : i32
    %c0_i32_1 = arith.constant 0 : i32
    return %c0_i32, %c0_i32_0 : i32, i32
  }
  func.func @transform_4(%arg0: i32) -> (i32, i32) {
    %c0_i32 = arith.constant 0 : i32
    %c0_i32_0 = arith.constant 0 : i32
    %c0_i32_1 = arith.constant 0 : i32
    return %c0_i32, %c0_i32_0 : i32, i32
  }
  func.func @transform_5(%arg0: i32) -> (i32, i32) {
    %c0_i32 = arith.constant 0 : i32
    %c0_i32_0 = arith.constant 0 : i32
    %c0_i32_1 = arith.constant 0 : i32
    return %c0_i32, %c0_i32_0 : i32, i32
  }
  func.func @transform_6(%arg0: i32) -> (i32, i32) {
    %c0_i32 = arith.constant 0 : i32
    %c0_i32_0 = arith.constant 0 : i32
    %c0_i32_1 = arith.constant 0 : i32
    return %c0_i32, %c0_i32_0 : i32, i32
  }
  func.func @transform_7(%arg0: i32) -> (i32, i32) {
    %c0_i32 = arith.constant 0 : i32
    %c0_i32_0 = arith.constant 0 : i32
    return %arg0, %c0_i32 : i32, i32
  }
}

</mosaic_0001>

<llo_original>
// kernel: tpu_custom_call.1
$region0: #{tpu_custom_call.1}
  #allocation0 [shape = 'u32[]', space=smem, size = 0x4, offset = 0x4, fixed_abs, tag = 'smem constant byte address 0x4 - core index']
  #allocation1 [shape = 'u32[144,128]{1,0:T(1,128)}', space=vmem, size = 0x12000, scoped, tag = 'internal scratch']
  %s0 = inlined_call_operand.vmem [shape: f32[512,64], index: 0, kind: input, shape index: {}]
  %s1 = inlined_call_operand.vmem [shape: f32[64,32], index: 1, kind: input, shape index: {}]
  %s2 = inlined_call_operand.vmem [shape: f32[1,32], index: 2, kind: input, shape index: {}]
  %s3 = inlined_call_operand.vmem [shape: f32[32,32], index: 3, kind: input, shape index: {}]
  %s4 = inlined_call_operand.vmem [shape: f32[1,32], index: 4, kind: input, shape index: {}]
  %s5 = inlined_call_operand.vmem [shape: f32[32,128], index: 5, kind: input, shape index: {}]
  %s6 = inlined_call_operand.vmem [shape: f32[1,128], index: 6, kind: input, shape index: {}]
  %s7 = inlined_call_operand.hbm [shape: f32[512,128], index: 7, kind: output, shape index: {}]
  %s8 = sld [smem:[#allocation0]]
  $region61: #{tpu_custom_call.1} parent=0
    _
  %s10 = ssub.s32 1, %s8
  %s11 = scalar_select 0, %s10, %s8
  $region1: #{tpu_custom_call.1} parent=0
    #allocation2 [shape = 'u8[262144]{0}', space=vmem, size = 0x40000, scoped, tag = 'output window, operand 0']
    #allocation3 [shape = 's32[2]{0}', space=sflag, size = 0x8, scoped, tag = 'scoped memory for tpu_custom_call.1']
    %12 = vsyncpa [#allocation3], 0
    %s13 = scalar_lea.sflag [#allocation3], 1
    %14 = vsyncpa %s13, 0
    loop: start=0, step=1, limit=4
    $region2: #{tpu_custom_call.1} parent=1 // loop_pre_header
      _
    $region3: #{tpu_custom_call.1} parent=1 // loop_header
      %s16 = sphi 0, %s20
      %p17 = scmp.ge.s32.totalorder %s16, 4
      %s26 = sphi 0, %s28
      %s29 = sphi 0, %s26
      %s30 = sphi 0, %s29
      %s46 = sphi 0, %s30
      %s50 = sphi 0, %s50
      %s52 = sphi 0, %s50
      %s53 = sphi 0, %s52
      %s67 = sphi 0, %s53
      %s71 = sphi 0, %s71
      %s73 = sphi 0, %s71
      %s74 = sphi 0, %s73
      %s88 = sphi 0, %s74
      %s92 = sphi 0, %s92
      %s94 = sphi 0, %s92
      %s95 = sphi 0, %s94
      %s109 = sphi 0, %s95
      %s113 = sphi 0, %s113
      %s115 = sphi 0, %s113
      %s116 = sphi 0, %s115
      %s130 = sphi 0, %s116
      %s134 = sphi 0, %s134
      %s136 = sphi 0, %s134
      %s137 = sphi 0, %s136
      %s151 = sphi 0, %s137
      %s155 = sphi 0, %s155
      %s157 = sphi 0, %s155
      %s158 = sphi 0, %s157
      %s172 = sphi 0, %s158
      %s178 = sphi 0, %s180
      %s181 = sphi 0, %s178
      %s182 = sphi 0, %s181
      %s198 = sphi 0, %s182
    $region4: #{tpu_custom_call.1} parent=1 // loop_header_branch
      %19 = sbr.rel (%p17) target = $region8
    $region5: #{tpu_custom_call.1} parent=1 // loop_body
      %s21 = ssub.s32 %s16, 1
      %s22 = ssub.s32 %s16, 2
      %s23 = sadd.s32 %s16, 1
      %s24 = ssub.s32 %s16, %s23
      %p25 = scmp.eq.s32.totalorder %s24, 0
      %s27 = sadd.s32 %s26, 1
      %s28 = scalar_select %p25, %s26, %s27
      %p31 = pneg %p25
      %p32 = scmp.eq.s32.totalorder %s16, 1
      %p33 = por %p31, %p32
      %p34 = scmp.ne.s32.totalorder %s26, %s29
      %p35 = scmp.eq.s32.totalorder %s16, 0
      %p36 = por %p34, %p35
      %p37 = scmp.ne.s32.totalorder %s26, %s29
      %p38 = scmp.eq.s32.totalorder %s21, 1
      %p39 = por %p37, %p38
      %p40 = scmp.ne.s32.totalorder %s29, %s30
      %p41 = scmp.eq.s32.totalorder %s21, 0
      %p42 = por %p40, %p41
      %p43 = scmp.ne.s32.totalorder %s29, %s30
      %p44 = scmp.eq.s32.totalorder %s22, 1
      %p45 = por %p43, %p44
      %p47 = scmp.ne.s32.totalorder %s30, %s46
      %p48 = scmp.eq.s32.totalorder %s22, 0
      %p49 = por %p47, %p48
      %s51 = sadd.s32 %s50, 1
      %p54 = scmp.eq.s32.totalorder %s16, 1
      %p55 = scmp.ne.s32.totalorder %s50, %s52
      %p56 = scmp.eq.s32.totalorder %s16, 0
      %p57 = por %p55, %p56
      %p58 = scmp.ne.s32.totalorder %s50, %s52
      %p59 = scmp.eq.s32.totalorder %s21, 1
      %p60 = por %p58, %p59
      %p61 = scmp.ne.s32.totalorder %s52, %s53
      %p62 = scmp.eq.s32.totalorder %s21, 0
      %p63 = por %p61, %p62
      %p64 = scmp.ne.s32.totalorder %s52, %s53
      %p65 = scmp.eq.s32.totalorder %s22, 1
      %p66 = por %p64, %p65
      %p68 = scmp.ne.s32.totalorder %s53, %s67
      %p69 = scmp.eq.s32.totalorder %s22, 0
      %p70 = por %p68, %p69
      %s72 = sadd.s32 %s71, 1
      %p75 = scmp.eq.s32.totalorder %s16, 1
      %p76 = scmp.ne.s32.totalorder %s71, %s73
      %p77 = scmp.eq.s32.totalorder %s16, 0
      %p78 = por %p76, %p77
      %p79 = scmp.ne.s32.totalorder %s71, %s73
      %p80 = scmp.eq.s32.totalorder %s21, 1
      %p81 = por %p79, %p80
      %p82 = scmp.ne.s32.totalorder %s73, %s74
      %p83 = scmp.eq.s32.totalorder %s21, 0
      %p84 = por %p82, %p83
      %p85 = scmp.ne.s32.totalorder %s73, %s74
      %p86 = scmp.eq.s32.totalorder %s22, 1
      %p87 = por %p85, %p86
      %p89 = scmp.ne.s32.totalorder %s74, %s88
      %p90 = scmp.eq.s32.totalorder %s22, 0
      %p91 = por %p89, %p90
      %s93 = sadd.s32 %s92, 1
      %p96 = scmp.eq.s32.totalorder %s16, 1
      %p97 = scmp.ne.s32.totalorder %s92, %s94
      %p98 = scmp.eq.s32.totalorder %s16, 0
      %p99 = por %p97, %p98
      %p100 = scmp.ne.s32.totalorder %s92, %s94
      %p101 = scmp.eq.s32.totalorder %s21, 1
      %p102 = por %p100, %p101
      %p103 = scmp.ne.s32.totalorder %s94, %s95
      %p104 = scmp.eq.s32.totalorder %s21, 0
      %p105 = por %p103, %p104
      %p106 = scmp.ne.s32.totalorder %s94, %s95
      %p107 = scmp.eq.s32.totalorder %s22, 1
      %p108 = por %p106, %p107
      %p110 = scmp.ne.s32.totalorder %s95, %s109
      %p111 = scmp.eq.s32.totalorder %s22, 0
      %p112 = por %p110, %p111
      %s114 = sadd.s32 %s113, 1
      %p117 = scmp.eq.s32.totalorder %s16, 1
      %p118 = scmp.ne.s32.totalorder %s113, %s115
      %p119 = scmp.eq.s32.totalorder %s16, 0
      %p120 = por %p118, %p119
      %p121 = scmp.ne.s32.totalorder %s113, %s115
      %p122 = scmp.eq.s32.totalorder %s21, 1
      %p123 = por %p121, %p122
      %p124 = scmp.ne.s32.totalorder %s115, %s116
      %p125 = scmp.eq.s32.totalorder %s21, 0
      %p126 = por %p124, %p125
      %p127 = scmp.ne.s32.totalorder %s115, %s116
      %p128 = scmp.eq.s32.totalorder %s22, 1
      %p129 = por %p127, %p128
      %p131 = scmp.ne.s32.totalorder %s116, %s130
      %p132 = scmp.eq.s32.totalorder %s22, 0
      %p133 = por %p131, %p132
      %s135 = sadd.s32 %s134, 1
      %p138 = scmp.eq.s32.totalorder %s16, 1
      %p139 = scmp.ne.s32.totalorder %s134, %s136
      %p140 = scmp.eq.s32.totalorder %s16, 0
      %p141 = por %p139, %p140
      %p142 = scmp.ne.s32.totalorder %s134, %s136
      %p143 = scmp.eq.s32.totalorder %s21, 1
      %p144 = por %p142, %p143
      %p145 = scmp.ne.s32.totalorder %s136, %s137
      %p146 = scmp.eq.s32.totalorder %s21, 0
      %p147 = por %p145, %p146
      %p148 = scmp.ne.s32.totalorder %s136, %s137
      %p149 = scmp.eq.s32.totalorder %s22, 1
      %p150 = por %p148, %p149
      %p152 = scmp.ne.s32.totalorder %s137, %s151
      %p153 = scmp.eq.s32.totalorder %s22, 0
      %p154 = por %p152, %p153
      %s156 = sadd.s32 %s155, 1
      %p159 = scmp.eq.s32.totalorder %s16, 1
      %p160 = scmp.ne.s32.totalorder %s155, %s157
      %p161 = scmp.eq.s32.totalorder %s16, 0
      %p162 = por %p160, %p161
      %p163 = scmp.ne.s32.totalorder %s155, %s157
      %p164 = scmp.eq.s32.totalorder %s21, 1
      %p165 = por %p163, %p164
      %p166 = scmp.ne.s32.totalorder %s157, %s158
      %p167 = scmp.eq.s32.totalorder %s21, 0
      %p168 = por %p166, %p167
      %p169 = scmp.ne.s32.totalorder %s157, %s158
      %p170 = scmp.eq.s32.totalorder %s22, 1
      %p171 = por %p169, %p170
      %p173 = scmp.ne.s32.totalorder %s158, %s172
      %p174 = scmp.eq.s32.totalorder %s22, 0
      %p175 = por %p173, %p174
      %s176 = ssub.s32 %s16, %s23
      %p177 = scmp.eq.s32.totalorder %s176, 0
      %s179 = sadd.s32 %s178, 1
      %s180 = scalar_select %p177, %s178, %s179
      %p183 = pneg %p177
      %p184 = scmp.eq.s32.totalorder %s16, 1
      %p185 = por %p183, %p184
      %p186 = scmp.ne.s32.totalorder %s178, %s181
      %p187 = scmp.eq.s32.totalorder %s16, 0
      %p188 = por %p186, %p187
      %p189 = scmp.ne.s32.totalorder %s178, %s181
      %p190 = scmp.eq.s32.totalorder %s21, 1
      %p191 = por %p189, %p190
      %p192 = scmp.ne.s32.totalorder %s181, %s182
      %p193 = scmp.eq.s32.totalorder %s21, 0
      %p194 = por %p192, %p193
      %p195 = scmp.ne.s32.totalorder %s181, %s182
      %p196 = scmp.eq.s32.totalorder %s22, 1
      %p197 = por %p195, %p196
      %p199 = scmp.ne.s32.totalorder %s182, %s198
      %p200 = scmp.eq.s32.totalorder %s22, 0
      %p201 = por %p199, %p200
      %p202 = scmp.le.s32.totalorder 1, %s16
      %p203 = scmp.lt.s32.totalorder %s16, 3
      %p204 = pnand %p202, %p203
      %p205 = pneg %p204
      // Predicated region
      $region9: #{tpu_custom_call.1} parent=5 // pred_check
        _
      $region10: #{tpu_custom_call.1} parent=5 // pred_check_branch
        %207 = sbr.rel (%p204) target = $region12
      $region11: #{tpu_custom_call.1} parent=5 // pred_region
        %s208 = ssub.s32 %s16, 1
        // Predicated region
        $region13: #{tpu_custom_call.1} parent=11 // pred_check
          %p209 = pneg %p63
        $region14: #{tpu_custom_call.1} parent=11 // pred_check_branch
          %211 = sbr.rel (%p209) target = $region16
        $region15: #{tpu_custom_call.1} parent=11 // pred_region
          _
        $region16: #{tpu_custom_call.1} parent=11 // pred_fallthru
          _
        // Predicated region
        $region17: #{tpu_custom_call.1} parent=11 // pred_check
          %p212 = pneg %p84
        $region18: #{tpu_custom_call.1} parent=11 // pred_check_branch
          %214 = sbr.rel (%p212) target = $region20
        $region19: #{tpu_custom_call.1} parent=11 // pred_region
          _
        $region20: #{tpu_custom_call.1} parent=11 // pred_fallthru
          _
        // Predicated region
        $region21: #{tpu_custom_call.1} parent=11 // pred_check
          %p215 = pneg %p105
        $region22: #{tpu_custom_call.1} parent=11 // pred_check_branch
          %217 = sbr.rel (%p215) target = $region24
        $region23: #{tpu_custom_call.1} parent=11 // pred_region
          _
        $region24: #{tpu_custom_call.1} parent=11 // pred_fallthru
          _
        // Predicated region
        $region25: #{tpu_custom_call.1} parent=11 // pred_check
          %p218 = pneg %p126
        $region26: #{tpu_custom_call.1} parent=11 // pred_check_branch
          %220 = sbr.rel (%p218) target = $region28
        $region27: #{tpu_custom_call.1} parent=11 // pred_region
          _
        $region28: #{tpu_custom_call.1} parent=11 // pred_fallthru
          _
        // Predicated region
        $region29: #{tpu_custom_call.1} parent=11 // pred_check
          %p221 = pneg %p147
        $region30: #{tpu_custom_call.1} parent=11 // pred_check_branch
          %223 = sbr.rel (%p221) target = $region32
        $region31: #{tpu_custom_call.1} parent=11 // pred_region
          _
        $region32: #{tpu_custom_call.1} parent=11 // pred_fallthru
          _
        // Predicated region
        $region33: #{tpu_custom_call.1} parent=11 // pred_check
          %p224 = pneg %p168
        $region34: #{tpu_custom_call.1} parent=11 // pred_check_branch
          %226 = sbr.rel (%p224) target = $region36
        $region35: #{tpu_custom_call.1} parent=11 // pred_region
          _
        $region36: #{tpu_custom_call.1} parent=11 // pred_fallthru
          _
      $region12: #{tpu_custom_call.1} parent=5 // pred_fallthru
        _
      %p227 = scmp.lt.s32.totalorder %s16, 2
      // Predicated region
      $region37: #{tpu_custom_call.1} parent=5 // pred_check
        %p228 = pneg %p227
      $region38: #{tpu_custom_call.1} parent=5 // pred_check_branch
        %230 = sbr.rel (%p228) target = $region40
      $region39: #{tpu_custom_call.1} parent=5 // pred_region
        // Predicated region
        $region41: #{tpu_custom_call.1} parent=39 // pred_check
          %p231 = pneg %p36
        $region42: #{tpu_custom_call.1} parent=39 // pred_check_branch
          %233 = sbr.rel (%p231) target = $region44
        $region43: #{tpu_custom_call.1} parent=39 // pred_region
          %s234 = smul.u32 32, %s16
          %p235 = scmp.lt.s32.totalorder %s234, 63
          %s236 = scalar_select %p235, %s234, 63
          %s237 = smul.addr %s236, 8
          %s238 = scalar_lea.vmem %s0, %s237
          %s239 = smul.u32 32, %s16
        $region44: #{tpu_custom_call.1} parent=39 // pred_fallthru
          _
      $region40: #{tpu_custom_call.1} parent=5 // pred_fallthru
        _
      %p240 = scmp.le.s32.totalorder 1, %s16
      %p241 = scmp.lt.s32.totalorder %s16, 3
      %p242 = pnand %p240, %p241
      %p243 = pneg %p242
      // Predicated region
      $region45: #{tpu_custom_call.1} parent=5 // pred_check
        _
      $region46: #{tpu_custom_call.1} parent=5 // pred_check_branch
        %245 = sbr.rel (%p242) target = $region48
      $region47: #{tpu_custom_call.1} parent=5 // pred_region
        %s246 = ssub.s32 %s16, 1
        %s247 = smul.u32 32, %s21
        %p248 = scmp.lt.s32.totalorder %s247, 63
        %s249 = scalar_select %p248, %s247, 63
        %s250 = smul.addr %s249, 8
        %s251 = scalar_lea.vmem %s0, %s250
        %p252 = pneg %p42
        %p253 = pneg %p39
        %p254 = pneg %p63
        %p255 = pneg %p60
        %p256 = pneg %p84
        %p257 = pneg %p81
        %p258 = pneg %p105
        %p259 = pneg %p102
        %p260 = pneg %p126
        %p261 = pneg %p123
        %p262 = pneg %p147
        %p263 = pneg %p144
        %p264 = pneg %p168
        %p265 = pneg %p165
        %p266 = pneg %p194
        %p267 = pneg %p191
        %s268 = sand.u32 %s181, 1
        %s269 = scalar_lea.sflag [#allocation3], %s268
        %s270 = sand.u32 %s181, 1
        %s271 = smul.addr %s270, 256
        %s272 = scalar_lea.vmem [#allocation2], %s271
        %s273 = smul.u32 32, %s21
        %p274 = scmp.lt.s32.totalorder %s273, 63
        %s275 = scalar_select %p274, %s273, 63
        %s276 = smul.addr %s275, 8
        %s277 = scalar_lea.vmem %s0, %s276
        %s278 = smul.u32 32, %s21
        %s279 = smul.u32 32, %s21
        %v280 = vld [vmem:[%s277] sm:$0xff]
        %v281 = vld [vmem:[%s277 + $0x8] sm:$0xff]
        %v282 = vld [vmem:[%s277 + $0x10] sm:$0xff]
        %v283 = vld [vmem:[%s277 + $0x18] sm:$0xff]
        %v284 = vld [vmem:[%s277 + $0x20] sm:$0xff]
        %v285 = vld [vmem:[%s277 + $0x28] sm:$0xff]
        %v286 = vld [vmem:[%s277 + $0x30] sm:$0xff]
        %v287 = vld [vmem:[%s277 + $0x38] sm:$0xff]
        %v288 = vld [vmem:[%s277 + $0x40] sm:$0xff]
        %v289 = vld [vmem:[%s277 + $0x48] sm:$0xff]
        %v290 = vld [vmem:[%s277 + $0x50] sm:$0xff]
        %v291 = vld [vmem:[%s277 + $0x58] sm:$0xff]
        %v292 = vld [vmem:[%s277 + $0x60] sm:$0xff]
        %v293 = vld [vmem:[%s277 + $0x68] sm:$0xff]
        %v294 = vld [vmem:[%s277 + $0x70] sm:$0xff]
        %v295 = vld [vmem:[%s277 + $0x78] sm:$0xff]
        %v296 = vld [vmem:[%s277 + $0x80] sm:$0xff]
        %v297 = vld [vmem:[%s277 + $0x88] sm:$0xff]
        %v298 = vld [vmem:[%s277 + $0x90] sm:$0xff]
        %v299 = vld [vmem:[%s277 + $0x98] sm:$0xff]
        %v300 = vld [vmem:[%s277 + $0xa0] sm:$0xff]
        %v301 = vld [vmem:[%s277 + $0xa8] sm:$0xff]
        %v302 = vld [vmem:[%s277 + $0xb0] sm:$0xff]
        %v303 = vld [vmem:[%s277 + $0xb8] sm:$0xff]
        %v304 = vld [vmem:[%s277 + $0xc0] sm:$0xff]
        %v305 = vld [vmem:[%s277 + $0xc8] sm:$0xff]
        %v306 = vld [vmem:[%s277 + $0xd0] sm:$0xff]
        %v307 = vld [vmem:[%s277 + $0xd8] sm:$0xff]
        %v308 = vld [vmem:[%s277 + $0xe0] sm:$0xff]
        %v309 = vld [vmem:[%s277 + $0xe8] sm:$0xff]
        %v310 = vld [vmem:[%s277 + $0xf0] sm:$0xff]
        %v311 = vld [vmem:[%s277 + $0xf8] sm:$0xff]
        %v312 = vld [vmem:[%s1] sm:$0xff]
        %v313 = vld [vmem:[%s1 + $0x8] sm:$0xff]
        %v314 = vld [vmem:[%s1 + $0x10] sm:$0xff]
        %v315 = vld [vmem:[%s1 + $0x18] sm:$0xff]
        %v316 = vld [vmem:[%s1 + $0x20] sm:$0xff]
        %v317 = vld [vmem:[%s1 + $0x28] sm:$0xff]
        %v318 = vld [vmem:[%s1 + $0x30] sm:$0xff]
        %v319 = vld [vmem:[%s1 + $0x38] sm:$0xff]
        %v320 = vld [vmem:[%s2] sm:$0x1]
        %v322 = vlaneseq
        %v323 = vshrl.u32 %v322, 7
        %v324 = vsub.s32 0, %v323
        %v325 = vrot.slane %v320, %v324
        %vm327 = vcmask 523264
        %v329 = vsel %vm327, %v280, 0
        %v332 = vsel %vm327, %v281, 0
        %v335 = vsel %vm327, %v282, 0
        %v338 = vsel %vm327, %v283, 0
        %v341 = vsel %vm327, %v284, 0
        %v344 = vsel %vm327, %v285, 0
        %v347 = vsel %vm327, %v286, 0
        %v350 = vsel %vm327, %v287, 0
        %v353 = vsel %vm327, %v288, 0
        %v356 = vsel %vm327, %v289, 0
        %v359 = vsel %vm327, %v290, 0
        %v362 = vsel %vm327, %v291, 0
        %v365 = vsel %vm327, %v292, 0
        %v368 = vsel %vm327, %v293, 0
        %v371 = vsel %vm327, %v294, 0
        %v374 = vsel %vm327, %v295, 0
        %v377 = vsel %vm327, %v296, 0
        %v380 = vsel %vm327, %v297, 0
        %v383 = vsel %vm327, %v298, 0
        %v386 = vsel %vm327, %v299, 0
        %v389 = vsel %vm327, %v300, 0
        %v392 = vsel %vm327, %v301, 0
        %v395 = vsel %vm327, %v302, 0
        %v398 = vsel %vm327, %v303, 0
        %v401 = vsel %vm327, %v304, 0
        %v404 = vsel %vm327, %v305, 0
        %v407 = vsel %vm327, %v306, 0
        %v410 = vsel %vm327, %v307, 0
        %v413 = vsel %vm327, %v308, 0
        %v416 = vsel %vm327, %v309, 0
        %v419 = vsel %vm327, %v310, 0
        %v422 = vsel %vm327, %v311, 0
        %424 = vmatprep.subr.mxu0 0.0
        %425 = vmatpush1.msra.mxu0 %v312
        %426 = vmatprep.subr.mxu0 0.0
        %427 = vmatpush1.msra.mxu0 %v313
        %428 = vmatprep.subr.mxu0 0.0
        %429 = vmatpush1.msra.mxu0 %v314
        %430 = vmatprep.subr.mxu0 0.0
        %431 = vmatpush1.msra.mxu0 %v315
        %432 = vmatprep.subr.mxu0 0.0
        %433 = vmatpush1.msra.mxu0 %v316
        %434 = vmatprep.subr.mxu0 0.0
        %435 = vmatpush1.msra.mxu0 %v317
        %436 = vmatprep.subr.mxu0 0.0
        %437 = vmatpush1.msra.mxu0 %v318
        %438 = vmatprep.subr.mxu0 0.0
        %439 = vmatpush1.msra.mxu0 %v319
        %440 = vmatprep.subr.mxu0 0.0
        %441 = vmatpush1.msra.mxu0 0.0
        %442 = vmatprep.subr.mxu0 0.0
        %443 = vmatpush1.msra.mxu0 0.0
        %444 = vmatprep.subr.mxu0 0.0
        %445 = vmatpush1.msra.mxu0 0.0
        %446 = vmatprep.subr.mxu0 0.0
        %447 = vmatpush1.msra.mxu0 0.0
        %448 = vmatprep.subr.mxu0 0.0
        %449 = vmatpush1.msra.mxu0 0.0
        %450 = vmatprep.subr.mxu0 0.0
        %451 = vmatpush1.msra.mxu0 0.0
        %452 = vmatprep.subr.mxu0 0.0
        %453 = vmatpush1.msra.mxu0 0.0
        %454 = vmatprep.subr.mxu0 0.0
        %455 = vmatpush1.msra.mxu0 0.0
        %456 = vmatprep.subr.mxu0 0.0
        %457 = vmatpush1.msra.mxu0 0.0
        %458 = vmatprep.subr.mxu0 0.0
        %459 = vmatpush1.msra.mxu0 0.0
        %460 = vmatprep.subr.mxu0 0.0
        %461 = vmatpush1.msra.mxu0 0.0
        %462 = vmatprep.subr.mxu0 0.0
        %463 = vmatpush1.msra.mxu0 0.0
        %464 = vmatprep.subr.mxu0 0.0
        %465 = vmatpush1.msra.mxu0 0.0
        %466 = vmatprep.subr.mxu0 0.0
        %467 = vmatpush1.msra.mxu0 0.0
        %468 = vmatprep.subr.mxu0 0.0
        %469 = vmatpush1.msra.mxu0 0.0
        %470 = vmatprep.subr.mxu0 0.0
        %471 = vmatpush1.msra.mxu0 0.0
        %472 = vmatprep.subr.mxu0 0.0
        %473 = vmatpush1.msra.mxu0 0.0
        %474 = vmatprep.subr.mxu0 0.0
        %475 = vmatpush1.msra.mxu0 0.0
        %476 = vmatprep.subr.mxu0 0.0
        %477 = vmatpush1.msra.mxu0 0.0
        %478 = vmatprep.subr.mxu0 0.0
        %479 = vmatpush1.msra.mxu0 0.0
        %480 = vmatprep.subr.mxu0 0.0
        %481 = vmatpush1.msra.mxu0 0.0
        %482 = vmatprep.subr.mxu0 0.0
        %483 = vmatpush1.msra.mxu0 0.0
        %484 = vmatprep.subr.mxu0 0.0
        %485 = vmatpush1.msra.mxu0 0.0
        %486 = vmatprep.subr.mxu0 0.0
        %487 = vmatpush1.msra.mxu0 0.0
        %488 = vmatprep.mubr.f32.mxu0 0.0
        %489 = vmatmul.mubr.f32.gmra.mrb[0].mxu0 %v329
        %v490 = vpop.f32.mrb[0].mxu0
        %v491 = vadd.f32 %v325, %v490
        %v492 = vpop.f32.mrb[0].mxu0
        %493 = vmatprep.mubr.f32.mxu0 0.0
        %494 = vmatmul.mubr.f32.gmra.mrb[0].mxu0 %v332
        %v495 = vpop.f32.mrb[0].mxu0
        %v496 = vadd.f32 %v325, %v495
        %v497 = vpop.f32.mrb[0].mxu0
        %498 = vmatprep.mubr.f32.mxu0 0.0
        %499 = vmatmul.mubr.f32.gmra.mrb[0].mxu0 %v335
        %v500 = vpop.f32.mrb[0].mxu0
        %v501 = vadd.f32 %v325, %v500
        %v502 = vpop.f32.mrb[0].mxu0
        %503 = vmatprep.mubr.f32.mxu0 0.0
        %504 = vmatmul.mubr.f32.gmra.mrb[0].mxu0 %v338
        %v505 = vpop.f32.mrb[0].mxu0
        %v506 = vadd.f32 %v325, %v505
        %v507 = vpop.f32.mrb[0].mxu0
        %508 = vmatprep.mubr.f32.mxu0 0.0
        %509 = vmatmul.mubr.f32.gmra.mrb[0].mxu0 %v341
        %v510 = vpop.f32.mrb[0].mxu0
        %v511 = vadd.f32 %v325, %v510
        %v512 = vpop.f32.mrb[0].mxu0
        %513 = vmatprep.mubr.f32.mxu0 0.0
        %514 = vmatmul.mubr.f32.gmra.mrb[0].mxu0 %v344
        %v515 = vpop.f32.mrb[0].mxu0
        %v516 = vadd.f32 %v325, %v515
        %v517 = vpop.f32.mrb[0].mxu0
        %518 = vmatprep.mubr.f32.mxu0 0.0
        %519 = vmatmul.mubr.f32.gmra.mrb[0].mxu0 %v347
        %v520 = vpop.f32.mrb[0].mxu0
        %v521 = vadd.f32 %v325, %v520
        %v522 = vpop.f32.mrb[0].mxu0
        %523 = vmatprep.mubr.f32.mxu0 0.0
        %524 = vmatmul.mubr.f32.gmra.mrb[0].mxu0 %v350
        %v525 = vpop.f32.mrb[0].mxu0
        %v526 = vadd.f32 %v325, %v525
        %v527 = vpop.f32.mrb[0].mxu0
        %528 = vmatprep.mubr.f32.mxu0 0.0
        %529 = vmatmul.mubr.f32.gmra.mrb[0].mxu0 %v353
        %v530 = vpop.f32.mrb[0].mxu0
        %v531 = vadd.f32 %v325, %v530
        %v532 = vpop.f32.mrb[0].mxu0
        %533 = vmatprep.mubr.f32.mxu0 0.0
        %534 = vmatmul.mubr.f32.gmra.mrb[0].mxu0 %v356
        %v535 = vpop.f32.mrb[0].mxu0
        %v536 = vadd.f32 %v325, %v535
        %v537 = vpop.f32.mrb[0].mxu0
        %538 = vmatprep.mubr.f32.mxu0 0.0
        %539 = vmatmul.mubr.f32.gmra.mrb[0].mxu0 %v359
        %v540 = vpop.f32.mrb[0].mxu0
        %v541 = vadd.f32 %v325, %v540
        %v542 = vpop.f32.mrb[0].mxu0
        %543 = vmatprep.mubr.f32.mxu0 0.0
        %544 = vmatmul.mubr.f32.gmra.mrb[0].mxu0 %v362
        %v545 = vpop.f32.mrb[0].mxu0
        %v546 = vadd.f32 %v325, %v545
        %v547 = vpop.f32.mrb[0].mxu0
        %548 = vmatprep.mubr.f32.mxu0 0.0
        %549 = vmatmul.mubr.f32.gmra.mrb[0].mxu0 %v365
        %v550 = vpop.f32.mrb[0].mxu0
        %v551 = vadd.f32 %v325, %v550
        %v552 = vpop.f32.mrb[0].mxu0
        %553 = vmatprep.mubr.f32.mxu0 0.0
        %554 = vmatmul.mubr.f32.gmra.mrb[0].mxu0 %v368
        %v555 = vpop.f32.mrb[0].mxu0
        %v556 = vadd.f32 %v325, %v555
        %v557 = vpop.f32.mrb[0].mxu0
        %558 = vmatprep.mubr.f32.mxu0 0.0
        %559 = vmatmul.mubr.f32.gmra.mrb[0].mxu0 %v371
        %v560 = vpop.f32.mrb[0].mxu0
        %v561 = vadd.f32 %v325, %v560
        %v562 = vpop.f32.mrb[0].mxu0
        %563 = vmatprep.mubr.f32.mxu0 0.0
        %564 = vmatmul.mubr.f32.gmra.mrb[0].mxu0 %v374
        %v565 = vpop.f32.mrb[0].mxu0
        %v566 = vadd.f32 %v325, %v565
        %v567 = vpop.f32.mrb[0].mxu0
        %568 = vmatprep.mubr.f32.mxu0 0.0
        %569 = vmatmul.mubr.f32.gmra.mrb[0].mxu0 %v377
        %v570 = vpop.f32.mrb[0].mxu0
        %v571 = vadd.f32 %v325, %v570
        %v572 = vpop.f32.mrb[0].mxu0
        %573 = vmatprep.mubr.f32.mxu0 0.0
        %574 = vmatmul.mubr.f32.gmra.mrb[0].mxu0 %v380
        %v575 = vpop.f32.mrb[0].mxu0
        %v576 = vadd.f32 %v325, %v575
        %v577 = vpop.f32.mrb[0].mxu0
        %578 = vmatprep.mubr.f32.mxu0 0.0
        %579 = vmatmul.mubr.f32.gmra.mrb[0].mxu0 %v383
        %v580 = vpop.f32.mrb[0].mxu0
        %v581 = vadd.f32 %v325, %v580
        %v582 = vpop.f32.mrb[0].mxu0
        %583 = vmatprep.mubr.f32.mxu0 0.0
        %584 = vmatmul.mubr.f32.gmra.mrb[0].mxu0 %v386
        %v585 = vpop.f32.mrb[0].mxu0
        %v586 = vadd.f32 %v325, %v585
        %v587 = vpop.f32.mrb[0].mxu0
        %588 = vmatprep.mubr.f32.mxu0 0.0
        %589 = vmatmul.mubr.f32.gmra.mrb[0].mxu0 %v389
        %v590 = vpop.f32.mrb[0].mxu0
        %v591 = vadd.f32 %v325, %v590
        %v592 = vpop.f32.mrb[0].mxu0
        %593 = vmatprep.mubr.f32.mxu0 0.0
        %594 = vmatmul.mubr.f32.gmra.mrb[0].mxu0 %v392
        %v595 = vpop.f32.mrb[0].mxu0
        %v596 = vadd.f32 %v325, %v595
        %v597 = vpop.f32.mrb[0].mxu0
        %598 = vmatprep.mubr.f32.mxu0 0.0
        %599 = vmatmul.mubr.f32.gmra.mrb[0].mxu0 %v395
        %v600 = vpop.f32.mrb[0].mxu0
        %v601 = vadd.f32 %v325, %v600
        %v602 = vpop.f32.mrb[0].mxu0
        %603 = vmatprep.mubr.f32.mxu0 0.0
        %604 = vmatmul.mubr.f32.gmra.mrb[0].mxu0 %v398
        %v605 = vpop.f32.mrb[0].mxu0
        %v606 = vadd.f32 %v325, %v605
        %v607 = vpop.f32.mrb[0].mxu0
        %608 = vmatprep.mubr.f32.mxu0 0.0
        %609 = vmatmul.mubr.f32.gmra.mrb[0].mxu0 %v401
        %v610 = vpop.f32.mrb[0].mxu0
        %v611 = vadd.f32 %v325, %v610
        %v612 = vpop.f32.mrb[0].mxu0
        %613 = vmatprep.mubr.f32.mxu0 0.0
        %614 = vmatmul.mubr.f32.gmra.mrb[0].mxu0 %v404
        %v615 = vpop.f32.mrb[0].mxu0
        %v616 = vadd.f32 %v325, %v615
        %v617 = vpop.f32.mrb[0].mxu0
        %618 = vmatprep.mubr.f32.mxu0 0.0
        %619 = vmatmul.mubr.f32.gmra.mrb[0].mxu0 %v407
        %v620 = vpop.f32.mrb[0].mxu0
        %v621 = vadd.f32 %v325, %v620
        %v622 = vpop.f32.mrb[0].mxu0
        %623 = vmatprep.mubr.f32.mxu0 0.0
        %624 = vmatmul.mubr.f32.gmra.mrb[0].mxu0 %v410
        %v625 = vpop.f32.mrb[0].mxu0
        %v626 = vadd.f32 %v325, %v625
        %v627 = vpop.f32.mrb[0].mxu0
        %628 = vmatprep.mubr.f32.mxu0 0.0
        %629 = vmatmul.mubr.f32.gmra.mrb[0].mxu0 %v413
        %v630 = vpop.f32.mrb[0].mxu0
        %v631 = vadd.f32 %v325, %v630
        %v632 = vpop.f32.mrb[0].mxu0
        %633 = vmatprep.mubr.f32.mxu0 0.0
        %634 = vmatmul.mubr.f32.gmra.mrb[0].mxu0 %v416
        %v635 = vpop.f32.mrb[0].mxu0
        %v636 = vadd.f32 %v325, %v635
        %v637 = vpop.f32.mrb[0].mxu0
        %638 = vmatprep.mubr.f32.mxu0 0.0
        %639 = vmatmul.mubr.f32.gmra.mrb[0].mxu0 %v419
        %v640 = vpop.f32.mrb[0].mxu0
        %v641 = vadd.f32 %v325, %v640
        %v642 = vpop.f32.mrb[0].mxu0
        %643 = vmatprep.mubr.f32.mxu0 0.0
        %644 = vmatmul.mubr.f32.gmra.mrb[0].mxu0 %v422
        %v645 = vpop.f32.mrb[0].mxu0
        %v646 = vadd.f32 %v325, %v645
        %v647 = vpop.f32.mrb[0].mxu0
        %648 = vdwg.mxu0
        %v649 = vmax.f32 %v491, 0.0
        %v650 = vmax.f32 %v496, 0.0
        %v651 = vmax.f32 %v501, 0.0
        %v652 = vmax.f32 %v506, 0.0
        %v653 = vmax.f32 %v511, 0.0
        %v654 = vmax.f32 %v516, 0.0
        %v655 = vmax.f32 %v521, 0.0
        %v656 = vmax.f32 %v526, 0.0
        %v657 = vmax.f32 %v531, 0.0
        %v658 = vmax.f32 %v536, 0.0
        %v659 = vmax.f32 %v541, 0.0
        %v660 = vmax.f32 %v546, 0.0
        %v661 = vmax.f32 %v551, 0.0
        %v662 = vmax.f32 %v556, 0.0
        %v663 = vmax.f32 %v561, 0.0
        %v664 = vmax.f32 %v566, 0.0
        %v665 = vmax.f32 %v571, 0.0
        %v666 = vmax.f32 %v576, 0.0
        %v667 = vmax.f32 %v581, 0.0
        %v668 = vmax.f32 %v586, 0.0
        %v669 = vmax.f32 %v591, 0.0
        %v670 = vmax.f32 %v596, 0.0
        %v671 = vmax.f32 %v601, 0.0
        %v672 = vmax.f32 %v606, 0.0
        %v673 = vmax.f32 %v611, 0.0
        %v674 = vmax.f32 %v616, 0.0
        %v675 = vmax.f32 %v621, 0.0
        %v676 = vmax.f32 %v626, 0.0
        %v677 = vmax.f32 %v631, 0.0
        %v678 = vmax.f32 %v636, 0.0
        %v679 = vmax.f32 %v641, 0.0
        %v680 = vmax.f32 %v646, 0.0
        %v681 = vld [vmem:[%s3] sm:$0xff]
        %v682 = vld [vmem:[%s3 + $0x8] sm:$0xff]
        %v683 = vld [vmem:[%s3 + $0x10] sm:$0xff]
        %v684 = vld [vmem:[%s3 + $0x18] sm:$0xff]
        %v685 = vld [vmem:[%s4] sm:$0x1]
        %v687 = vlaneseq
        %v688 = vshrl.u32 %v687, 7
        %v689 = vsub.s32 0, %v688
        %v690 = vrot.slane %v685, %v689
        %vm692 = vcmask 261120
        %v694 = vsel %vm692, %v649, 0
        %v697 = vsel %vm692, %v650, 0
        %v700 = vsel %vm692, %v651, 0
        %v703 = vsel %vm692, %v652, 0
        %v706 = vsel %vm692, %v653, 0
        %v709 = vsel %vm692, %v654, 0
        %v712 = vsel %vm692, %v655, 0
        %v715 = vsel %vm692, %v656, 0
        %v718 = vsel %vm692, %v657, 0
        %v721 = vsel %vm692, %v658, 0
        %v724 = vsel %vm692, %v659, 0
        %v727 = vsel %vm692, %v660, 0
        %v730 = vsel %vm692, %v661, 0
        %v733 = vsel %vm692, %v662, 0
        %v736 = vsel %vm692, %v663, 0
        %v739 = vsel %vm692, %v664, 0
        %v742 = vsel %vm692, %v665, 0
        %v745 = vsel %vm692, %v666, 0
        %v748 = vsel %vm692, %v667, 0
        %v751 = vsel %vm692, %v668, 0
        %v754 = vsel %vm692, %v669, 0
        %v757 = vsel %vm692, %v670, 0
        %v760 = vsel %vm692, %v671, 0
        %v763 = vsel %vm692, %v672, 0
        %v766 = vsel %vm692, %v673, 0
        %v769 = vsel %vm692, %v674, 0
        %v772 = vsel %vm692, %v675, 0
        %v775 = vsel %vm692, %v676, 0
        %v778 = vsel %vm692, %v677, 0
        %v781 = vsel %vm692, %v678, 0
        %v784 = vsel %vm692, %v679, 0
        %v787 = vsel %vm692, %v680, 0
        %789 = vmatprep.subr.mxu0 0.0
        %790 = vmatpush1.msra.mxu0 %v681
        %791 = vmatprep.subr.mxu0 0.0
        %792 = vmatpush1.msra.mxu0 %v682
        %793 = vmatprep.subr.mxu0 0.0
        %794 = vmatpush1.msra.mxu0 %v683
        %795 = vmatprep.subr.mxu0 0.0
        %796 = vmatpush1.msra.mxu0 %v684
        %797 = vmatprep.subr.mxu0 0.0
        %798 = vmatpush1.msra.mxu0 0.0
        %799 = vmatprep.subr.mxu0 0.0
        %800 = vmatpush1.msra.mxu0 0.0
        %801 = vmatprep.subr.mxu0 0.0
        %802 = vmatpush1.msra.mxu0 0.0
        %803 = vmatprep.subr.mxu0 0.0
        %804 = vmatpush1.msra.mxu0 0.0
        %805 = vmatprep.subr.mxu0 0.0
        %806 = vmatpush1.msra.mxu0 0.0
        %807 = vmatprep.subr.mxu0 0.0
        %808 = vmatpush1.msra.mxu0 0.0
        %809 = vmatprep.subr.mxu0 0.0
        %810 = vmatpush1.msra.mxu0 0.0
        %811 = vmatprep.subr.mxu0 0.0
        %812 = vmatpush1.msra.mxu0 0.0
        %813 = vmatprep.subr.mxu0 0.0
        %814 = vmatpush1.msra.mxu0 0.0
        %815 = vmatprep.subr.mxu0 0.0
        %816 = vmatpush1.msra.mxu0 0.0
        %817 = vmatprep.subr.mxu0 0.0
        %818 = vmatpush1.msra.mxu0 0.0
        %819 = vmatprep.subr.mxu0 0.0
        %820 = vmatpush1.msra.mxu0 0.0
        %821 = vmatprep.subr.mxu0 0.0
        %822 = vmatpush1.msra.mxu0 0.0
        %823 = vmatprep.subr.mxu0 0.0
        %824 = vmatpush1.msra.mxu0 0.0
        %825 = vmatprep.subr.mxu0 0.0
        %826 = vmatpush1.msra.mxu0 0.0
        %827 = vmatprep.subr.mxu0 0.0
        %828 = vmatpush1.msra.mxu0 0.0
        %829 = vmatprep.subr.mxu0 0.0
        %830 = vmatpush1.msra.mxu0 0.0
        %831 = vmatprep.subr.mxu0 0.0
        %832 = vmatpush1.msra.mxu0 0.0
        %833 = vmatprep.subr.mxu0 0.0
        %834 = vmatpush1.msra.mxu0 0.0
        %835 = vmatprep.subr.mxu0 0.0
        %836 = vmatpush1.msra.mxu0 0.0
        %837 = vmatprep.subr.mxu0 0.0
        %838 = vmatpush1.msra.mxu0 0.0
        %839 = vmatprep.subr.mxu0 0.0
        %840 = vmatpush1.msra.mxu0 0.0
        %841 = vmatprep.subr.mxu0 0.0
        %842 = vmatpush1.msra.mxu0 0.0
        %843 = vmatprep.subr.mxu0 0.0
        %844 = vmatpush1.msra.mxu0 0.0
        %845 = vmatprep.subr.mxu0 0.0
        %846 = vmatpush1.msra.mxu0 0.0
        %847 = vmatprep.subr.mxu0 0.0
        %848 = vmatpush1.msra.mxu0 0.0
        %849 = vmatprep.subr.mxu0 0.0
        %850 = vmatpush1.msra.mxu0 0.0
        %851 = vmatprep.subr.mxu0 0.0
        %852 = vmatpush1.msra.mxu0 0.0
        %853 = vmatprep.mubr.f32.mxu0 0.0
        %854 = vmatmul.mubr.f32.gmra.mrb[0].mxu0 %v694
        %v855 = vpop.f32.mrb[0].mxu0
        %v856 = vadd.f32 %v690, %v855
        %v857 = vpop.f32.mrb[0].mxu0
        %858 = vmatprep.mubr.f32.mxu0 0.0
        %859 = vmatmul.mubr.f32.gmra.mrb[0].mxu0 %v697
        %v860 = vpop.f32.mrb[0].mxu0
        %v861 = vadd.f32 %v690, %v860
        %v862 = vpop.f32.mrb[0].mxu0
        %863 = vmatprep.mubr.f32.mxu0 0.0
        %864 = vmatmul.mubr.f32.gmra.mrb[0].mxu0 %v700
        %v865 = vpop.f32.mrb[0].mxu0
        %v866 = vadd.f32 %v690, %v865
        %v867 = vpop.f32.mrb[0].mxu0
        %868 = vmatprep.mubr.f32.mxu0 0.0
        %869 = vmatmul.mubr.f32.gmra.mrb[0].mxu0 %v703
        %v870 = vpop.f32.mrb[0].mxu0
        %v871 = vadd.f32 %v690, %v870
        %v872 = vpop.f32.mrb[0].mxu0
        %873 = vmatprep.mubr.f32.mxu0 0.0
        %874 = vmatmul.mubr.f32.gmra.mrb[0].mxu0 %v706
        %v875 = vpop.f32.mrb[0].mxu0
        %v876 = vadd.f32 %v690, %v875
        %v877 = vpop.f32.mrb[0].mxu0
        %878 = vmatprep.mubr.f32.mxu0 0.0
        %879 = vmatmul.mubr.f32.gmra.mrb[0].mxu0 %v709
        %v880 = vpop.f32.mrb[0].mxu0
        %v881 = vadd.f32 %v690, %v880
        %v882 = vpop.f32.mrb[0].mxu0
        %883 = vmatprep.mubr.f32.mxu0 0.0
        %884 = vmatmul.mubr.f32.gmra.mrb[0].mxu0 %v712
        %v885 = vpop.f32.mrb[0].mxu0
        %v886 = vadd.f32 %v690, %v885
        %v887 = vpop.f32.mrb[0].mxu0
        %888 = vmatprep.mubr.f32.mxu0 0.0
        %889 = vmatmul.mubr.f32.gmra.mrb[0].mxu0 %v715
        %v890 = vpop.f32.mrb[0].mxu0
        %v891 = vadd.f32 %v690, %v890
        %v892 = vpop.f32.mrb[0].mxu0
        %893 = vmatprep.mubr.f32.mxu0 0.0
        %894 = vmatmul.mubr.f32.gmra.mrb[0].mxu0 %v718
        %v895 = vpop.f32.mrb[0].mxu0
        %v896 = vadd.f32 %v690, %v895
        %v897 = vpop.f32.mrb[0].mxu0
        %898 = vmatprep.mubr.f32.mxu0 0.0
        %899 = vmatmul.mubr.f32.gmra.mrb[0].mxu0 %v721
        %v900 = vpop.f32.mrb[0].mxu0
        %v901 = vadd.f32 %v690, %v900
        %v902 = vpop.f32.mrb[0].mxu0
        %903 = vmatprep.mubr.f32.mxu0 0.0
        %904 = vmatmul.mubr.f32.gmra.mrb[0].mxu0 %v724
        %v905 = vpop.f32.mrb[0].mxu0
        %v906 = vadd.f32 %v690, %v905
        %v907 = vpop.f32.mrb[0].mxu0
        %908 = vmatprep.mubr.f32.mxu0 0.0
        %909 = vmatmul.mubr.f32.gmra.mrb[0].mxu0 %v727
        %v910 = vpop.f32.mrb[0].mxu0
        %v911 = vadd.f32 %v690, %v910
        %v912 = vpop.f32.mrb[0].mxu0
        %913 = vmatprep.mubr.f32.mxu0 0.0
        %914 = vmatmul.mubr.f32.gmra.mrb[0].mxu0 %v730
        %v915 = vpop.f32.mrb[0].mxu0
        %v916 = vadd.f32 %v690, %v915
        %v917 = vpop.f32.mrb[0].mxu0
        %918 = vmatprep.mubr.f32.mxu0 0.0
        %919 = vmatmul.mubr.f32.gmra.mrb[0].mxu0 %v733
        %v920 = vpop.f32.mrb[0].mxu0
        %v921 = vadd.f32 %v690, %v920
        %v922 = vpop.f32.mrb[0].mxu0
        %923 = vmatprep.mubr.f32.mxu0 0.0
        %924 = vmatmul.mubr.f32.gmra.mrb[0].mxu0 %v736
        %v925 = vpop.f32.mrb[0].mxu0
        %v926 = vadd.f32 %v690, %v925
        %v927 = vpop.f32.mrb[0].mxu0
        %928 = vmatprep.mubr.f32.mxu0 0.0
        %929 = vmatmul.mubr.f32.gmra.mrb[0].mxu0 %v739
        %v930 = vpop.f32.mrb[0].mxu0
        %v931 = vadd.f32 %v690, %v930
        %v932 = vpop.f32.mrb[0].mxu0
        %933 = vmatprep.mubr.f32.mxu0 0.0
        %934 = vmatmul.mubr.f32.gmra.mrb[0].mxu0 %v742
        %v935 = vpop.f32.mrb[0].mxu0
        %v936 = vadd.f32 %v690, %v935
        %v937 = vpop.f32.mrb[0].mxu0
        %938 = vmatprep.mubr.f32.mxu0 0.0
        %939 = vmatmul.mubr.f32.gmra.mrb[0].mxu0 %v745
        %v940 = vpop.f32.mrb[0].mxu0
        %v941 = vadd.f32 %v690, %v940
        %v942 = vpop.f32.mrb[0].mxu0
        %943 = vmatprep.mubr.f32.mxu0 0.0
        %944 = vmatmul.mubr.f32.gmra.mrb[0].mxu0 %v748
        %v945 = vpop.f32.mrb[0].mxu0
        %v946 = vadd.f32 %v690, %v945
        %v947 = vpop.f32.mrb[0].mxu0
        %948 = vmatprep.mubr.f32.mxu0 0.0
        %949 = vmatmul.mubr.f32.gmra.mrb[0].mxu0 %v751
        %v950 = vpop.f32.mrb[0].mxu0
        %v951 = vadd.f32 %v690, %v950
        %v952 = vpop.f32.mrb[0].mxu0
        %953 = vmatprep.mubr.f32.mxu0 0.0
        %954 = vmatmul.mubr.f32.gmra.mrb[0].mxu0 %v754
        %v955 = vpop.f32.mrb[0].mxu0
        %v956 = vadd.f32 %v690, %v955
        %v957 = vpop.f32.mrb[0].mxu0
        %958 = vmatprep.mubr.f32.mxu0 0.0
        %959 = vmatmul.mubr.f32.gmra.mrb[0].mxu0 %v757
        %v960 = vpop.f32.mrb[0].mxu0
        %v961 = vadd.f32 %v690, %v960
        %v962 = vpop.f32.mrb[0].mxu0
        %963 = vmatprep.mubr.f32.mxu0 0.0
        %964 = vmatmul.mubr.f32.gmra.mrb[0].mxu0 %v760
        %v965 = vpop.f32.mrb[0].mxu0
        %v966 = vadd.f32 %v690, %v965
        %v967 = vpop.f32.mrb[0].mxu0
        %968 = vmatprep.mubr.f32.mxu0 0.0
        %969 = vmatmul.mubr.f32.gmra.mrb[0].mxu0 %v763
        %v970 = vpop.f32.mrb[0].mxu0
        %v971 = vadd.f32 %v690, %v970
        %v972 = vpop.f32.mrb[0].mxu0
        %973 = vmatprep.mubr.f32.mxu0 0.0
        %974 = vmatmul.mubr.f32.gmra.mrb[0].mxu0 %v766
        %v975 = vpop.f32.mrb[0].mxu0
        %v976 = vadd.f32 %v690, %v975
        %v977 = vpop.f32.mrb[0].mxu0
        %978 = vmatprep.mubr.f32.mxu0 0.0
        %979 = vmatmul.mubr.f32.gmra.mrb[0].mxu0 %v769
        %v980 = vpop.f32.mrb[0].mxu0
        %v981 = vadd.f32 %v690, %v980
        %v982 = vpop.f32.mrb[0].mxu0
        %983 = vmatprep.mubr.f32.mxu0 0.0
        %984 = vmatmul.mubr.f32.gmra.mrb[0].mxu0 %v772
        %v985 = vpop.f32.mrb[0].mxu0
        %v986 = vadd.f32 %v690, %v985
        %v987 = vpop.f32.mrb[0].mxu0
        %988 = vmatprep.mubr.f32.mxu0 0.0
        %989 = vmatmul.mubr.f32.gmra.mrb[0].mxu0 %v775
        %v990 = vpop.f32.mrb[0].mxu0
        %v991 = vadd.f32 %v690, %v990
        %v992 = vpop.f32.mrb[0].mxu0
        %993 = vmatprep.mubr.f32.mxu0 0.0
        %994 = vmatmul.mubr.f32.gmra.mrb[0].mxu0 %v778
        %v995 = vpop.f32.mrb[0].mxu0
        %v996 = vadd.f32 %v690, %v995
        %v997 = vpop.f32.mrb[0].mxu0
        %998 = vmatprep.mubr.f32.mxu0 0.0
        %999 = vmatmul.mubr.f32.gmra.mrb[0].mxu0 %v781
        %v1000 = vpop.f32.mrb[0].mxu0
        %v1001 = vadd.f32 %v690, %v1000
        %v1002 = vpop.f32.mrb[0].mxu0
        %1003 = vmatprep.mubr.f32.mxu0 0.0
        %1004 = vmatmul.mubr.f32.gmra.mrb[0].mxu0 %v784
        %v1005 = vpop.f32.mrb[0].mxu0
        %v1006 = vadd.f32 %v690, %v1005
        %v1007 = vpop.f32.mrb[0].mxu0
        %1008 = vmatprep.mubr.f32.mxu0 0.0
        %1009 = vmatmul.mubr.f32.gmra.mrb[0].mxu0 %v787
        %v1010 = vpop.f32.mrb[0].mxu0
        %v1011 = vadd.f32 %v690, %v1010
        %v1012 = vpop.f32.mrb[0].mxu0
        %1013 = vdwg.mxu0
        %v1014 = vmax.f32 %v856, 0.0
        %v1015 = vmax.f32 %v861, 0.0
        %v1016 = vmax.f32 %v866, 0.0
        %v1017 = vmax.f32 %v871, 0.0
        %v1018 = vmax.f32 %v876, 0.0
        %v1019 = vmax.f32 %v881, 0.0
        %v1020 = vmax.f32 %v886, 0.0
        %v1021 = vmax.f32 %v891, 0.0
        %v1022 = vmax.f32 %v896, 0.0
        %v1023 = vmax.f32 %v901, 0.0
        %v1024 = vmax.f32 %v906, 0.0
        %v1025 = vmax.f32 %v911, 0.0
        %v1026 = vmax.f32 %v916, 0.0
        %v1027 = vmax.f32 %v921, 0.0
        %v1028 = vmax.f32 %v926, 0.0
        %v1029 = vmax.f32 %v931, 0.0
        %v1030 = vmax.f32 %v936, 0.0
        %v1031 = vmax.f32 %v941, 0.0
        %v1032 = vmax.f32 %v946, 0.0
        %v1033 = vmax.f32 %v951, 0.0
        %v1034 = vmax.f32 %v956, 0.0
        %v1035 = vmax.f32 %v961, 0.0
        %v1036 = vmax.f32 %v966, 0.0
        %v1037 = vmax.f32 %v971, 0.0
        %v1038 = vmax.f32 %v976, 0.0
        %v1039 = vmax.f32 %v981, 0.0
        %v1040 = vmax.f32 %v986, 0.0
        %v1041 = vmax.f32 %v991, 0.0
        %v1042 = vmax.f32 %v996, 0.0
        %v1043 = vmax.f32 %v1001, 0.0
        %v1044 = vmax.f32 %v1006, 0.0
        %v1045 = vmax.f32 %v1011, 0.0
        %v1046 = vld [vmem:[%s5] sm:$0xff]
        %v1047 = vld [vmem:[%s5 + $0x8] sm:$0xff]
        %v1048 = vld [vmem:[%s5 + $0x10] sm:$0xff]
        %v1049 = vld [vmem:[%s5 + $0x18] sm:$0xff]
        %v1050 = vld [vmem:[%s6] sm:$0x1]
        %v1052 = vlaneseq
        %v1053 = vshrl.u32 %v1052, 7
        %v1054 = vsub.s32 0, %v1053
        %v1055 = vrot.slane %v1050, %v1054
        %v1058 = vsel %vm692, %v1014, 0
        %v1061 = vsel %vm692, %v1015, 0
        %v1064 = vsel %vm692, %v1016, 0
        %v1067 = vsel %vm692, %v1017, 0
        %v1070 = vsel %vm692, %v1018, 0
        %v1073 = vsel %vm692, %v1019, 0
        %v1076 = vsel %vm692, %v1020, 0
        %v1079 = vsel %vm692, %v1021, 0
        %v1082 = vsel %vm692, %v1022, 0
        %v1085 = vsel %vm692, %v1023, 0
        %v1088 = vsel %vm692, %v1024, 0
        %v1091 = vsel %vm692, %v1025, 0
        %v1094 = vsel %vm692, %v1026, 0
        %v1097 = vsel %vm692, %v1027, 0
        %v1100 = vsel %vm692, %v1028, 0
        %v1103 = vsel %vm692, %v1029, 0
        %v1106 = vsel %vm692, %v1030, 0
        %v1109 = vsel %vm692, %v1031, 0
        %v1112 = vsel %vm692, %v1032, 0
        %v1115 = vsel %vm692, %v1033, 0
        %v1118 = vsel %vm692, %v1034, 0
        %v1121 = vsel %vm692, %v1035, 0
        %v1124 = vsel %vm692, %v1036, 0
        %v1127 = vsel %vm692, %v1037, 0
        %v1130 = vsel %vm692, %v1038, 0
        %v1133 = vsel %vm692, %v1039, 0
        %v1136 = vsel %vm692, %v1040, 0
        %v1139 = vsel %vm692, %v1041, 0
        %v1142 = vsel %vm692, %v1042, 0
        %v1145 = vsel %vm692, %v1043, 0
        %v1148 = vsel %vm692, %v1044, 0
        %v1151 = vsel %vm692, %v1045, 0
        %1153 = vmatprep.subr.mxu0 0.0
        %1154 = vmatpush1.msra.mxu0 %v1046
        %1155 = vmatprep.subr.mxu0 0.0
        %1156 = vmatpush1.msra.mxu0 %v1047
        %1157 = vmatprep.subr.mxu0 0.0
        %1158 = vmatpush1.msra.mxu0 %v1048
        %1159 = vmatprep.subr.mxu0 0.0
        %1160 = vmatpush1.msra.mxu0 %v1049
        %1161 = vmatprep.subr.mxu0 0.0
        %1162 = vmatpush1.msra.mxu0 0.0
        %1163 = vmatprep.subr.mxu0 0.0
        %1164 = vmatpush1.msra.mxu0 0.0
        %1165 = vmatprep.subr.mxu0 0.0
        %1166 = vmatpush1.msra.mxu0 0.0
        %1167 = vmatprep.subr.mxu0 0.0
        %1168 = vmatpush1.msra.mxu0 0.0
        %1169 = vmatprep.subr.mxu0 0.0
        %1170 = vmatpush1.msra.mxu0 0.0
        %1171 = vmatprep.subr.mxu0 0.0
        %1172 = vmatpush1.msra.mxu0 0.0
        %1173 = vmatprep.subr.mxu0 0.0
        %1174 = vmatpush1.msra.mxu0 0.0
        %1175 = vmatprep.subr.mxu0 0.0
        %1176 = vmatpush1.msra.mxu0 0.0
        %1177 = vmatprep.subr.mxu0 0.0
        %1178 = vmatpush1.msra.mxu0 0.0
        %1179 = vmatprep.subr.mxu0 0.0
        %1180 = vmatpush1.msra.mxu0 0.0
        %1181 = vmatprep.subr.mxu0 0.0
        %1182 = vmatpush1.msra.mxu0 0.0
        %1183 = vmatprep.subr.mxu0 0.0
        %1184 = vmatpush1.msra.mxu0 0.0
        %1185 = vmatprep.subr.mxu0 0.0
        %1186 = vmatpush1.msra.mxu0 0.0
        %1187 = vmatprep.subr.mxu0 0.0
        %1188 = vmatpush1.msra.mxu0 0.0
        %1189 = vmatprep.subr.mxu0 0.0
        %1190 = vmatpush1.msra.mxu0 0.0
        %1191 = vmatprep.subr.mxu0 0.0
        %1192 = vmatpush1.msra.mxu0 0.0
        %1193 = vmatprep.subr.mxu0 0.0
        %1194 = vmatpush1.msra.mxu0 0.0
        %1195 = vmatprep.subr.mxu0 0.0
        %1196 = vmatpush1.msra.mxu0 0.0
        %1197 = vmatprep.subr.mxu0 0.0
        %1198 = vmatpush1.msra.mxu0 0.0
        %1199 = vmatprep.subr.mxu0 0.0
        %1200 = vmatpush1.msra.mxu0 0.0
        %1201 = vmatprep.subr.mxu0 0.0
        %1202 = vmatpush1.msra.mxu0 0.0
        %1203 = vmatprep.subr.mxu0 0.0
        %1204 = vmatpush1.msra.mxu0 0.0
        %1205 = vmatprep.subr.mxu0 0.0
        %1206 = vmatpush1.msra.mxu0 0.0
        %1207 = vmatprep.subr.mxu0 0.0
        %1208 = vmatpush1.msra.mxu0 0.0
        %1209 = vmatprep.subr.mxu0 0.0
        %1210 = vmatpush1.msra.mxu0 0.0
        %1211 = vmatprep.subr.mxu0 0.0
        %1212 = vmatpush1.msra.mxu0 0.0
        %1213 = vmatprep.subr.mxu0 0.0
        %1214 = vmatpush1.msra.mxu0 0.0
        %1215 = vmatprep.subr.mxu0 0.0
        %1216 = vmatpush1.msra.mxu0 0.0
        %1217 = vmatprep.mubr.f32.mxu0 0.0
        %1218 = vmatmul.mubr.f32.gmra.mrb[0].mxu0 %v1058
        %v1219 = vpop.f32.mrb[0].mxu0
        %v1220 = vadd.f32 %v1055, %v1219
        %v1221 = vpop.f32.mrb[0].mxu0
        %1222 = vmatprep.mubr.f32.mxu0 0.0
        %1223 = vmatmul.mubr.f32.gmra.mrb[0].mxu0 %v1061
        %v1224 = vpop.f32.mrb[0].mxu0
        %v1225 = vadd.f32 %v1055, %v1224
        %v1226 = vpop.f32.mrb[0].mxu0
        %1227 = vmatprep.mubr.f32.mxu0 0.0
        %1228 = vmatmul.mubr.f32.gmra.mrb[0].mxu0 %v1064
        %v1229 = vpop.f32.mrb[0].mxu0
        %v1230 = vadd.f32 %v1055, %v1229
        %v1231 = vpop.f32.mrb[0].mxu0
        %1232 = vmatprep.mubr.f32.mxu0 0.0
        %1233 = vmatmul.mubr.f32.gmra.mrb[0].mxu0 %v1067
        %v1234 = vpop.f32.mrb[0].mxu0
        %v1235 = vadd.f32 %v1055, %v1234
        %v1236 = vpop.f32.mrb[0].mxu0
        %1237 = vmatprep.mubr.f32.mxu0 0.0
        %1238 = vmatmul.mubr.f32.gmra.mrb[0].mxu0 %v1070
        %v1239 = vpop.f32.mrb[0].mxu0
        %v1240 = vadd.f32 %v1055, %v1239
        %v1241 = vpop.f32.mrb[0].mxu0
        %1242 = vmatprep.mubr.f32.mxu0 0.0
        %1243 = vmatmul.mubr.f32.gmra.mrb[0].mxu0 %v1073
        %v1244 = vpop.f32.mrb[0].mxu0
        %v1245 = vadd.f32 %v1055, %v1244
        %v1246 = vpop.f32.mrb[0].mxu0
        %1247 = vmatprep.mubr.f32.mxu0 0.0
        %1248 = vmatmul.mubr.f32.gmra.mrb[0].mxu0 %v1076
        %v1249 = vpop.f32.mrb[0].mxu0
        %v1250 = vadd.f32 %v1055, %v1249
        %v1251 = vpop.f32.mrb[0].mxu0
        %1252 = vmatprep.mubr.f32.mxu0 0.0
        %1253 = vmatmul.mubr.f32.gmra.mrb[0].mxu0 %v1079
        %v1254 = vpop.f32.mrb[0].mxu0
        %v1255 = vadd.f32 %v1055, %v1254
        %v1256 = vpop.f32.mrb[0].mxu0
        %1257 = vmatprep.mubr.f32.mxu0 0.0
        %1258 = vmatmul.mubr.f32.gmra.mrb[0].mxu0 %v1082
        %v1259 = vpop.f32.mrb[0].mxu0
        %v1260 = vadd.f32 %v1055, %v1259
        %v1261 = vpop.f32.mrb[0].mxu0
        %1262 = vmatprep.mubr.f32.mxu0 0.0
        %1263 = vmatmul.mubr.f32.gmra.mrb[0].mxu0 %v1085
        %v1264 = vpop.f32.mrb[0].mxu0
        %v1265 = vadd.f32 %v1055, %v1264
        %v1266 = vpop.f32.mrb[0].mxu0
        %1267 = vmatprep.mubr.f32.mxu0 0.0
        %1268 = vmatmul.mubr.f32.gmra.mrb[0].mxu0 %v1088
        %v1269 = vpop.f32.mrb[0].mxu0
        %v1270 = vadd.f32 %v1055, %v1269
        %v1271 = vpop.f32.mrb[0].mxu0
        %1272 = vmatprep.mubr.f32.mxu0 0.0
        %1273 = vmatmul.mubr.f32.gmra.mrb[0].mxu0 %v1091
        %v1274 = vpop.f32.mrb[0].mxu0
        %v1275 = vadd.f32 %v1055, %v1274
        %v1276 = vpop.f32.mrb[0].mxu0
        %1277 = vmatprep.mubr.f32.mxu0 0.0
        %1278 = vmatmul.mubr.f32.gmra.mrb[0].mxu0 %v1094
        %v1279 = vpop.f32.mrb[0].mxu0
        %v1280 = vadd.f32 %v1055, %v1279
        %v1281 = vpop.f32.mrb[0].mxu0
        %1282 = vmatprep.mubr.f32.mxu0 0.0
        %1283 = vmatmul.mubr.f32.gmra.mrb[0].mxu0 %v1097
        %v1284 = vpop.f32.mrb[0].mxu0
        %v1285 = vadd.f32 %v1055, %v1284
        %v1286 = vpop.f32.mrb[0].mxu0
        %1287 = vmatprep.mubr.f32.mxu0 0.0
        %1288 = vmatmul.mubr.f32.gmra.mrb[0].mxu0 %v1100
        %v1289 = vpop.f32.mrb[0].mxu0
        %v1290 = vadd.f32 %v1055, %v1289
        %v1291 = vpop.f32.mrb[0].mxu0
        %1292 = vmatprep.mubr.f32.mxu0 0.0
        %1293 = vmatmul.mubr.f32.gmra.mrb[0].mxu0 %v1103
        %v1294 = vpop.f32.mrb[0].mxu0
        %v1295 = vadd.f32 %v1055, %v1294
        %v1296 = vpop.f32.mrb[0].mxu0
        %1297 = vmatprep.mubr.f32.mxu0 0.0
        %1298 = vmatmul.mubr.f32.gmra.mrb[0].mxu0 %v1106
        %v1299 = vpop.f32.mrb[0].mxu0
        %v1300 = vadd.f32 %v1055, %v1299
        %v1301 = vpop.f32.mrb[0].mxu0
        %1302 = vmatprep.mubr.f32.mxu0 0.0
        %1303 = vmatmul.mubr.f32.gmra.mrb[0].mxu0 %v1109
        %v1304 = vpop.f32.mrb[0].mxu0
        %v1305 = vadd.f32 %v1055, %v1304
        %v1306 = vpop.f32.mrb[0].mxu0
        %1307 = vmatprep.mubr.f32.mxu0 0.0
        %1308 = vmatmul.mubr.f32.gmra.mrb[0].mxu0 %v1112
        %v1309 = vpop.f32.mrb[0].mxu0
        %v1310 = vadd.f32 %v1055, %v1309
        %v1311 = vpop.f32.mrb[0].mxu0
        %1312 = vmatprep.mubr.f32.mxu0 0.0
        %1313 = vmatmul.mubr.f32.gmra.mrb[0].mxu0 %v1115
        %v1314 = vpop.f32.mrb[0].mxu0
        %v1315 = vadd.f32 %v1055, %v1314
        %v1316 = vpop.f32.mrb[0].mxu0
        %1317 = vmatprep.mubr.f32.mxu0 0.0
        %1318 = vmatmul.mubr.f32.gmra.mrb[0].mxu0 %v1118
        %v1319 = vpop.f32.mrb[0].mxu0
        %v1320 = vadd.f32 %v1055, %v1319
        %v1321 = vpop.f32.mrb[0].mxu0
        %1322 = vmatprep.mubr.f32.mxu0 0.0
        %1323 = vmatmul.mubr.f32.gmra.mrb[0].mxu0 %v1121
        %v1324 = vpop.f32.mrb[0].mxu0
        %v1325 = vadd.f32 %v1055, %v1324
        %v1326 = vpop.f32.mrb[0].mxu0
        %1327 = vmatprep.mubr.f32.mxu0 0.0
        %1328 = vmatmul.mubr.f32.gmra.mrb[0].mxu0 %v1124
        %v1329 = vpop.f32.mrb[0].mxu0
        %v1330 = vadd.f32 %v1055, %v1329
        %v1331 = vpop.f32.mrb[0].mxu0
        %1332 = vmatprep.mubr.f32.mxu0 0.0
        %1333 = vmatmul.mubr.f32.gmra.mrb[0].mxu0 %v1127
        %v1334 = vpop.f32.mrb[0].mxu0
        %v1335 = vadd.f32 %v1055, %v1334
        %v1336 = vpop.f32.mrb[0].mxu0
        %1337 = vmatprep.mubr.f32.mxu0 0.0
        %1338 = vmatmul.mubr.f32.gmra.mrb[0].mxu0 %v1130
        %v1339 = vpop.f32.mrb[0].mxu0
        %v1340 = vadd.f32 %v1055, %v1339
        %v1341 = vpop.f32.mrb[0].mxu0
        %1342 = vmatprep.mubr.f32.mxu0 0.0
        %1343 = vmatmul.mubr.f32.gmra.mrb[0].mxu0 %v1133
        %v1344 = vpop.f32.mrb[0].mxu0
        %v1345 = vadd.f32 %v1055, %v1344
        %v1346 = vpop.f32.mrb[0].mxu0
        %1347 = vmatprep.mubr.f32.mxu0 0.0
        %1348 = vmatmul.mubr.f32.gmra.mrb[0].mxu0 %v1136
        %v1349 = vpop.f32.mrb[0].mxu0
        %v1350 = vadd.f32 %v1055, %v1349
        %v1351 = vpop.f32.mrb[0].mxu0
        %1352 = vmatprep.mubr.f32.mxu0 0.0
        %1353 = vmatmul.mubr.f32.gmra.mrb[0].mxu0 %v1139
        %v1354 = vpop.f32.mrb[0].mxu0
        %v1355 = vadd.f32 %v1055, %v1354
        %v1356 = vpop.f32.mrb[0].mxu0
        %1357 = vmatprep.mubr.f32.mxu0 0.0
        %1358 = vmatmul.mubr.f32.gmra.mrb[0].mxu0 %v1142
        %v1359 = vpop.f32.mrb[0].mxu0
        %v1360 = vadd.f32 %v1055, %v1359
        %v1361 = vpop.f32.mrb[0].mxu0
        %1362 = vmatprep.mubr.f32.mxu0 0.0
        %1363 = vmatmul.mubr.f32.gmra.mrb[0].mxu0 %v1145
        %v1364 = vpop.f32.mrb[0].mxu0
        %v1365 = vadd.f32 %v1055, %v1364
        %v1366 = vpop.f32.mrb[0].mxu0
        %1367 = vmatprep.mubr.f32.mxu0 0.0
        %1368 = vmatmul.mubr.f32.gmra.mrb[0].mxu0 %v1148
        %v1369 = vpop.f32.mrb[0].mxu0
        %v1370 = vadd.f32 %v1055, %v1369
        %v1371 = vpop.f32.mrb[0].mxu0
        %1372 = vmatprep.mubr.f32.mxu0 0.0
        %1373 = vmatmul.mubr.f32.gmra.mrb[0].mxu0 %v1151
        %v1374 = vpop.f32.mrb[0].mxu0
        %v1375 = vadd.f32 %v1055, %v1374
        %v1376 = vpop.f32.mrb[0].mxu0
        %1377 = vdwg.mxu0
        %v1378 = vlaneseq
        %v1379 = vand.u32 %v1378, 127
        %vm1380 = vcmp.lt.s32.totalorder %v1379, 2
        %v1381 = vsel %vm1380, %v1220, -1e+30
        %v1382 = vsel %vm1380, %v1225, -1e+30
        %v1383 = vsel %vm1380, %v1230, -1e+30
        %v1384 = vsel %vm1380, %v1235, -1e+30
        %v1385 = vsel %vm1380, %v1240, -1e+30
        %v1386 = vsel %vm1380, %v1245, -1e+30
        %v1387 = vsel %vm1380, %v1250, -1e+30
        %v1388 = vsel %vm1380, %v1255, -1e+30
        %v1389 = vsel %vm1380, %v1260, -1e+30
        %v1390 = vsel %vm1380, %v1265, -1e+30
        %v1391 = vsel %vm1380, %v1270, -1e+30
        %v1392 = vsel %vm1380, %v1275, -1e+30
        %v1393 = vsel %vm1380, %v1280, -1e+30
        %v1394 = vsel %vm1380, %v1285, -1e+30
        %v1395 = vsel %vm1380, %v1290, -1e+30
        %v1396 = vsel %vm1380, %v1295, -1e+30
        %v1397 = vsel %vm1380, %v1300, -1e+30
        %v1398 = vsel %vm1380, %v1305, -1e+30
        %v1399 = vsel %vm1380, %v1310, -1e+30
        %v1400 = vsel %vm1380, %v1315, -1e+30
        %v1401 = vsel %vm1380, %v1320, -1e+30
        %v1402 = vsel %vm1380, %v1325, -1e+30
        %v1403 = vsel %vm1380, %v1330, -1e+30
        %v1404 = vsel %vm1380, %v1335, -1e+30
        %v1405 = vsel %vm1380, %v1340, -1e+30
        %v1406 = vsel %vm1380, %v1345, -1e+30
        %v1407 = vsel %vm1380, %v1350, -1e+30
        %v1408 = vsel %vm1380, %v1355, -1e+30
        %v1409 = vsel %vm1380, %v1360, -1e+30
        %v1410 = vsel %vm1380, %v1365, -1e+30
        %v1411 = vsel %vm1380, %v1370, -1e+30
        %v1412 = vsel %vm1380, %v1375, -1e+30
        %1413 = vmax.xlane.f32.xlu0 %v1381
        %v1414 = vpop.xlane.xlu0 %1413
        %1415 = vmax.xlane.f32.xlu0 %v1382
        %v1416 = vpop.xlane.xlu0 %1415
        %1417 = vmax.xlane.f32.xlu0 %v1383
        %v1418 = vpop.xlane.xlu0 %1417
        %1419 = vmax.xlane.f32.xlu0 %v1384
        %v1420 = vpop.xlane.xlu0 %1419
        %1421 = vmax.xlane.f32.xlu0 %v1385
        %v1422 = vpop.xlane.xlu0 %1421
        %1423 = vmax.xlane.f32.xlu0 %v1386
        %v1424 = vpop.xlane.xlu0 %1423
        %1425 = vmax.xlane.f32.xlu0 %v1387
        %v1426 = vpop.xlane.xlu0 %1425
        %1427 = vmax.xlane.f32.xlu0 %v1388
        %v1428 = vpop.xlane.xlu0 %1427
        %1429 = vmax.xlane.f32.xlu0 %v1389
        %v1430 = vpop.xlane.xlu0 %1429
        %1431 = vmax.xlane.f32.xlu0 %v1390
        %v1432 = vpop.xlane.xlu0 %1431
        %1433 = vmax.xlane.f32.xlu0 %v1391
        %v1434 = vpop.xlane.xlu0 %1433
        %1435 = vmax.xlane.f32.xlu0 %v1392
        %v1436 = vpop.xlane.xlu0 %1435
        %1437 = vmax.xlane.f32.xlu0 %v1393
        %v1438 = vpop.xlane.xlu0 %1437
        %1439 = vmax.xlane.f32.xlu0 %v1394
        %v1440 = vpop.xlane.xlu0 %1439
        %1441 = vmax.xlane.f32.xlu0 %v1395
        %v1442 = vpop.xlane.xlu0 %1441
        %1443 = vmax.xlane.f32.xlu0 %v1396
        %v1444 = vpop.xlane.xlu0 %1443
        %1445 = vmax.xlane.f32.xlu0 %v1397
        %v1446 = vpop.xlane.xlu0 %1445
        %1447 = vmax.xlane.f32.xlu0 %v1398
        %v1448 = vpop.xlane.xlu0 %1447
        %1449 = vmax.xlane.f32.xlu0 %v1399
        %v1450 = vpop.xlane.xlu0 %1449
        %1451 = vmax.xlane.f32.xlu0 %v1400
        %v1452 = vpop.xlane.xlu0 %1451
        %1453 = vmax.xlane.f32.xlu0 %v1401
        %v1454 = vpop.xlane.xlu0 %1453
        %1455 = vmax.xlane.f32.xlu0 %v1402
        %v1456 = vpop.xlane.xlu0 %1455
        %1457 = vmax.xlane.f32.xlu0 %v1403
        %v1458 = vpop.xlane.xlu0 %1457
        %1459 = vmax.xlane.f32.xlu0 %v1404
        %v1460 = vpop.xlane.xlu0 %1459
        %1461 = vmax.xlane.f32.xlu0 %v1405
        %v1462 = vpop.xlane.xlu0 %1461
        %1463 = vmax.xlane.f32.xlu0 %v1406
        %v1464 = vpop.xlane.xlu0 %1463
        %1465 = vmax.xlane.f32.xlu0 %v1407
        %v1466 = vpop.xlane.xlu0 %1465
        %1467 = vmax.xlane.f32.xlu0 %v1408
        %v1468 = vpop.xlane.xlu0 %1467
        %1469 = vmax.xlane.f32.xlu0 %v1409
        %v1470 = vpop.xlane.xlu0 %1469
        %1471 = vmax.xlane.f32.xlu0 %v1410
        %v1472 = vpop.xlane.xlu0 %1471
        %1473 = vmax.xlane.f32.xlu0 %v1411
        %v1474 = vpop.xlane.xlu0 %1473
        %1475 = vmax.xlane.f32.xlu0 %v1412
        %v1476 = vpop.xlane.xlu0 %1475
        %v1477 = vsub.f32 %v1381, %v1414
        %v1478 = vsub.f32 %v1382, %v1416
        %v1479 = vsub.f32 %v1383, %v1418
        %v1480 = vsub.f32 %v1384, %v1420
        %v1481 = vsub.f32 %v1385, %v1422
        %v1482 = vsub.f32 %v1386, %v1424
        %v1483 = vsub.f32 %v1387, %v1426
        %v1484 = vsub.f32 %v1388, %v1428
        %v1485 = vsub.f32 %v1389, %v1430
        %v1486 = vsub.f32 %v1390, %v1432
        %v1487 = vsub.f32 %v1391, %v1434
        %v1488 = vsub.f32 %v1392, %v1436
        %v1489 = vsub.f32 %v1393, %v1438
        %v1490 = vsub.f32 %v1394, %v1440
        %v1491 = vsub.f32 %v1395, %v1442
        %v1492 = vsub.f32 %v1396, %v1444
        %v1493 = vsub.f32 %v1397, %v1446
        %v1494 = vsub.f32 %v1398, %v1448
        %v1495 = vsub.f32 %v1399, %v1450
        %v1496 = vsub.f32 %v1400, %v1452
        %v1497 = vsub.f32 %v1401, %v1454
        %v1498 = vsub.f32 %v1402, %v1456
        %v1499 = vsub.f32 %v1403, %v1458
        %v1500 = vsub.f32 %v1404, %v1460
        %v1501 = vsub.f32 %v1405, %v1462
        %v1502 = vsub.f32 %v1406, %v1464
        %v1503 = vsub.f32 %v1407, %v1466
        %v1504 = vsub.f32 %v1408, %v1468
        %v1505 = vsub.f32 %v1409, %v1470
        %v1506 = vsub.f32 %v1410, %v1472
        %v1507 = vsub.f32 %v1411, %v1474
        %v1508 = vsub.f32 %v1412, %v1476
        %v1509 = vmul.f32 %v1477, 1.442695
        %v1510 = vpow.pop %v1509
        %v1511 = vmul.f32 %v1478, 1.442695
        %v1512 = vpow.pop %v1511
        %v1513 = vmul.f32 %v1479, 1.442695
        %v1514 = vpow.pop %v1513
        %v1515 = vmul.f32 %v1480, 1.442695
        %v1516 = vpow.pop %v1515
        %v1517 = vmul.f32 %v1481, 1.442695
        %v1518 = vpow.pop %v1517
        %v1519 = vmul.f32 %v1482, 1.442695
        %v1520 = vpow.pop %v1519
        %v1521 = vmul.f32 %v1483, 1.442695
        %v1522 = vpow.pop %v1521
        %v1523 = vmul.f32 %v1484, 1.442695
        %v1524 = vpow.pop %v1523
        %v1525 = vmul.f32 %v1485, 1.442695
        %v1526 = vpow.pop %v1525
        %v1527 = vmul.f32 %v1486, 1.442695
        %v1528 = vpow.pop %v1527
        %v1529 = vmul.f32 %v1487, 1.442695
        %v1530 = vpow.pop %v1529
        %v1531 = vmul.f32 %v1488, 1.442695
        %v1532 = vpow.pop %v1531
        %v1533 = vmul.f32 %v1489, 1.442695
        %v1534 = vpow.pop %v1533
        %v1535 = vmul.f32 %v1490, 1.442695
        %v1536 = vpow.pop %v1535
        %v1537 = vmul.f32 %v1491, 1.442695
        %v1538 = vpow.pop %v1537
        %v1539 = vmul.f32 %v1492, 1.442695
        %v1540 = vpow.pop %v1539
        %v1541 = vmul.f32 %v1493, 1.442695
        %v1542 = vpow.pop %v1541
        %v1543 = vmul.f32 %v1494, 1.442695
        %v1544 = vpow.pop %v1543
        %v1545 = vmul.f32 %v1495, 1.442695
        %v1546 = vpow.pop %v1545
        %v1547 = vmul.f32 %v1496, 1.442695
        %v1548 = vpow.pop %v1547
        %v1549 = vmul.f32 %v1497, 1.442695
        %v1550 = vpow.pop %v1549
        %v1551 = vmul.f32 %v1498, 1.442695
        %v1552 = vpow.pop %v1551
        %v1553 = vmul.f32 %v1499, 1.442695
        %v1554 = vpow.pop %v1553
        %v1555 = vmul.f32 %v1500, 1.442695
        %v1556 = vpow.pop %v1555
        %v1557 = vmul.f32 %v1501, 1.442695
        %v1558 = vpow.pop %v1557
        %v1559 = vmul.f32 %v1502, 1.442695
        %v1560 = vpow.pop %v1559
        %v1561 = vmul.f32 %v1503, 1.442695
        %v1562 = vpow.pop %v1561
        %v1563 = vmul.f32 %v1504, 1.442695
        %v1564 = vpow.pop %v1563
        %v1565 = vmul.f32 %v1505, 1.442695
        %v1566 = vpow.pop %v1565
        %v1567 = vmul.f32 %v1506, 1.442695
        %v1568 = vpow.pop %v1567
        %v1569 = vmul.f32 %v1507, 1.442695
        %v1570 = vpow.pop %v1569
        %v1571 = vmul.f32 %v1508, 1.442695
        %v1572 = vpow.pop %v1571
        %1573 = vadd.xlane.f32.xlu0 %v1510
        %v1574 = vpop.xlane.xlu0 %1573
        %1575 = vadd.xlane.f32.xlu0 %v1512
        %v1576 = vpop.xlane.xlu0 %1575
        %1577 = vadd.xlane.f32.xlu0 %v1514
        %v1578 = vpop.xlane.xlu0 %1577
        %1579 = vadd.xlane.f32.xlu0 %v1516
        %v1580 = vpop.xlane.xlu0 %1579
        %1581 = vadd.xlane.f32.xlu0 %v1518
        %v1582 = vpop.xlane.xlu0 %1581
        %1583 = vadd.xlane.f32.xlu0 %v1520
        %v1584 = vpop.xlane.xlu0 %1583
        %1585 = vadd.xlane.f32.xlu0 %v1522
        %v1586 = vpop.xlane.xlu0 %1585
        %1587 = vadd.xlane.f32.xlu0 %v1524
        %v1588 = vpop.xlane.xlu0 %1587
        %1589 = vadd.xlane.f32.xlu0 %v1526
        %v1590 = vpop.xlane.xlu0 %1589
        %1591 = vadd.xlane.f32.xlu0 %v1528
        %v1592 = vpop.xlane.xlu0 %1591
        %1593 = vadd.xlane.f32.xlu0 %v1530
        %v1594 = vpop.xlane.xlu0 %1593
        %1595 = vadd.xlane.f32.xlu0 %v1532
        %v1596 = vpop.xlane.xlu0 %1595
        %1597 = vadd.xlane.f32.xlu0 %v1534
        %v1598 = vpop.xlane.xlu0 %1597
        %1599 = vadd.xlane.f32.xlu0 %v1536
        %v1600 = vpop.xlane.xlu0 %1599
        %1601 = vadd.xlane.f32.xlu0 %v1538
        %v1602 = vpop.xlane.xlu0 %1601
        %1603 = vadd.xlane.f32.xlu0 %v1540
        %v1604 = vpop.xlane.xlu0 %1603
        %1605 = vadd.xlane.f32.xlu0 %v1542
        %v1606 = vpop.xlane.xlu0 %1605
        %1607 = vadd.xlane.f32.xlu0 %v1544
        %v1608 = vpop.xlane.xlu0 %1607
        %1609 = vadd.xlane.f32.xlu0 %v1546
        %v1610 = vpop.xlane.xlu0 %1609
        %1611 = vadd.xlane.f32.xlu0 %v1548
        %v1612 = vpop.xlane.xlu0 %1611
        %1613 = vadd.xlane.f32.xlu0 %v1550
        %v1614 = vpop.xlane.xlu0 %1613
        %1615 = vadd.xlane.f32.xlu0 %v1552
        %v1616 = vpop.xlane.xlu0 %1615
        %1617 = vadd.xlane.f32.xlu0 %v1554
        %v1618 = vpop.xlane.xlu0 %1617
        %1619 = vadd.xlane.f32.xlu0 %v1556
        %v1620 = vpop.xlane.xlu0 %1619
        %1621 = vadd.xlane.f32.xlu0 %v1558
        %v1622 = vpop.xlane.xlu0 %1621
        %1623 = vadd.xlane.f32.xlu0 %v1560
        %v1624 = vpop.xlane.xlu0 %1623
        %1625 = vadd.xlane.f32.xlu0 %v1562
        %v1626 = vpop.xlane.xlu0 %1625
        %1627 = vadd.xlane.f32.xlu0 %v1564
        %v1628 = vpop.xlane.xlu0 %1627
        %1629 = vadd.xlane.f32.xlu0 %v1566
        %v1630 = vpop.xlane.xlu0 %1629
        %1631 = vadd.xlane.f32.xlu0 %v1568
        %v1632 = vpop.xlane.xlu0 %1631
        %1633 = vadd.xlane.f32.xlu0 %v1570
        %v1634 = vpop.xlane.xlu0 %1633
        %1635 = vadd.xlane.f32.xlu0 %v1572
        %v1636 = vpop.xlane.xlu0 %1635
        %v1637 = vlog2.pop %v1574
        %v1638 = vmul.f32 %v1637, 0.6931472
        %v1639 = vlog2.pop %v1576
        %v1640 = vmul.f32 %v1639, 0.6931472
        %v1641 = vlog2.pop %v1578
        %v1642 = vmul.f32 %v1641, 0.6931472
        %v1643 = vlog2.pop %v1580
        %v1644 = vmul.f32 %v1643, 0.6931472
        %v1645 = vlog2.pop %v1582
        %v1646 = vmul.f32 %v1645, 0.6931472
        %v1647 = vlog2.pop %v1584
        %v1648 = vmul.f32 %v1647, 0.6931472
        %v1649 = vlog2.pop %v1586
        %v1650 = vmul.f32 %v1649, 0.6931472
        %v1651 = vlog2.pop %v1588
        %v1652 = vmul.f32 %v1651, 0.6931472
        %v1653 = vlog2.pop %v1590
        %v1654 = vmul.f32 %v1653, 0.6931472
        %v1655 = vlog2.pop %v1592
        %v1656 = vmul.f32 %v1655, 0.6931472
        %v1657 = vlog2.pop %v1594
        %v1658 = vmul.f32 %v1657, 0.6931472
        %v1659 = vlog2.pop %v1596
        %v1660 = vmul.f32 %v1659, 0.6931472
        %v1661 = vlog2.pop %v1598
        %v1662 = vmul.f32 %v1661, 0.6931472
        %v1663 = vlog2.pop %v1600
        %v1664 = vmul.f32 %v1663, 0.6931472
        %v1665 = vlog2.pop %v1602
        %v1666 = vmul.f32 %v1665, 0.6931472
        %v1667 = vlog2.pop %v1604
        %v1668 = vmul.f32 %v1667, 0.6931472
        %v1669 = vlog2.pop %v1606
        %v1670 = vmul.f32 %v1669, 0.6931472
        %v1671 = vlog2.pop %v1608
        %v1672 = vmul.f32 %v1671, 0.6931472
        %v1673 = vlog2.pop %v1610
        %v1674 = vmul.f32 %v1673, 0.6931472
        %v1675 = vlog2.pop %v1612
        %v1676 = vmul.f32 %v1675, 0.6931472
        %v1677 = vlog2.pop %v1614
        %v1678 = vmul.f32 %v1677, 0.6931472
        %v1679 = vlog2.pop %v1616
        %v1680 = vmul.f32 %v1679, 0.6931472
        %v1681 = vlog2.pop %v1618
        %v1682 = vmul.f32 %v1681, 0.6931472
        %v1683 = vlog2.pop %v1620
        %v1684 = vmul.f32 %v1683, 0.6931472
        %v1685 = vlog2.pop %v1622
        %v1686 = vmul.f32 %v1685, 0.6931472
        %v1687 = vlog2.pop %v1624
        %v1688 = vmul.f32 %v1687, 0.6931472
        %v1689 = vlog2.pop %v1626
        %v1690 = vmul.f32 %v1689, 0.6931472
        %v1691 = vlog2.pop %v1628
        %v1692 = vmul.f32 %v1691, 0.6931472
        %v1693 = vlog2.pop %v1630
        %v1694 = vmul.f32 %v1693, 0.6931472
        %v1695 = vlog2.pop %v1632
        %v1696 = vmul.f32 %v1695, 0.6931472
        %v1697 = vlog2.pop %v1634
        %v1698 = vmul.f32 %v1697, 0.6931472
        %v1699 = vlog2.pop %v1636
        %v1700 = vmul.f32 %v1699, 0.6931472
        %v1701 = vsub.f32 %v1477, %v1638
        %v1702 = vsub.f32 %v1478, %v1640
        %v1703 = vsub.f32 %v1479, %v1642
        %v1704 = vsub.f32 %v1480, %v1644
        %v1705 = vsub.f32 %v1481, %v1646
        %v1706 = vsub.f32 %v1482, %v1648
        %v1707 = vsub.f32 %v1483, %v1650
        %v1708 = vsub.f32 %v1484, %v1652
        %v1709 = vsub.f32 %v1485, %v1654
        %v1710 = vsub.f32 %v1486, %v1656
        %v1711 = vsub.f32 %v1487, %v1658
        %v1712 = vsub.f32 %v1488, %v1660
        %v1713 = vsub.f32 %v1489, %v1662
        %v1714 = vsub.f32 %v1490, %v1664
        %v1715 = vsub.f32 %v1491, %v1666
        %v1716 = vsub.f32 %v1492, %v1668
        %v1717 = vsub.f32 %v1493, %v1670
        %v1718 = vsub.f32 %v1494, %v1672
        %v1719 = vsub.f32 %v1495, %v1674
        %v1720 = vsub.f32 %v1496, %v1676
        %v1721 = vsub.f32 %v1497, %v1678
        %v1722 = vsub.f32 %v1498, %v1680
        %v1723 = vsub.f32 %v1499, %v1682
        %v1724 = vsub.f32 %v1500, %v1684
        %v1725 = vsub.f32 %v1501, %v1686
        %v1726 = vsub.f32 %v1502, %v1688
        %v1727 = vsub.f32 %v1503, %v1690
        %v1728 = vsub.f32 %v1504, %v1692
        %v1729 = vsub.f32 %v1505, %v1694
        %v1730 = vsub.f32 %v1506, %v1696
        %v1731 = vsub.f32 %v1507, %v1698
        %v1732 = vsub.f32 %v1508, %v1700
        %1733 = vst [vmem:[%s272] sm:$0xff] %v1701
        %1734 = vst [vmem:[%s272 + $0x8] sm:$0xff] %v1702
        %1735 = vst [vmem:[%s272 + $0x10] sm:$0xff] %v1703
        %1736 = vst [vmem:[%s272 + $0x18] sm:$0xff] %v1704
        %1737 = vst [vmem:[%s272 + $0x20] sm:$0xff] %v1705
        %1738 = vst [vmem:[%s272 + $0x28] sm:$0xff] %v1706
        %1739 = vst [vmem:[%s272 + $0x30] sm:$0xff] %v1707
        %1740 = vst [vmem:[%s272 + $0x38] sm:$0xff] %v1708
        %1741 = vst [vmem:[%s272 + $0x40] sm:$0xff] %v1709
        %1742 = vst [vmem:[%s272 + $0x48] sm:$0xff] %v1710
        %1743 = vst [vmem:[%s272 + $0x50] sm:$0xff] %v1711
        %1744 = vst [vmem:[%s272 + $0x58] sm:$0xff] %v1712
        %1745 = vst [vmem:[%s272 + $0x60] sm:$0xff] %v1713
        %1746 = vst [vmem:[%s272 + $0x68] sm:$0xff] %v1714
        %1747 = vst [vmem:[%s272 + $0x70] sm:$0xff] %v1715
        %1748 = vst [vmem:[%s272 + $0x78] sm:$0xff] %v1716
        %1749 = vst [vmem:[%s272 + $0x80] sm:$0xff] %v1717
        %1750 = vst [vmem:[%s272 + $0x88] sm:$0xff] %v1718
        %1751 = vst [vmem:[%s272 + $0x90] sm:$0xff] %v1719
        %1752 = vst [vmem:[%s272 + $0x98] sm:$0xff] %v1720
        %1753 = vst [vmem:[%s272 + $0xa0] sm:$0xff] %v1721
        %1754 = vst [vmem:[%s272 + $0xa8] sm:$0xff] %v1722
        %1755 = vst [vmem:[%s272 + $0xb0] sm:$0xff] %v1723
        %1756 = vst [vmem:[%s272 + $0xb8] sm:$0xff] %v1724
        %1757 = vst [vmem:[%s272 + $0xc0] sm:$0xff] %v1725
        %1758 = vst [vmem:[%s272 + $0xc8] sm:$0xff] %v1726
        %1759 = vst [vmem:[%s272 + $0xd0] sm:$0xff] %v1727
        %1760 = vst [vmem:[%s272 + $0xd8] sm:$0xff] %v1728
        %1761 = vst [vmem:[%s272 + $0xe0] sm:$0xff] %v1729
        %1762 = vst [vmem:[%s272 + $0xe8] sm:$0xff] %v1730
        %1763 = vst [vmem:[%s272 + $0xf0] sm:$0xff] %v1731
        %1764 = vst [vmem:[%s272 + $0xf8] sm:$0xff] %v1732
        %s1765 = sand.u32 %s181, 1
        %s1766 = scalar_lea.sflag [#allocation3], %s1765
        %s1767 = sand.u32 %s181, 1
        %s1768 = smul.addr %s1767, 256
        %s1769 = scalar_lea.vmem [#allocation2], %s1768
        // Predicated region
        $region49: #{tpu_custom_call.1} parent=47 // pred_check
          %p1770 = pneg %p191
        $region50: #{tpu_custom_call.1} parent=47 // pred_check_branch
          %1772 = sbr.rel (%p1770) target = $region52
        $region51: #{tpu_custom_call.1} parent=47 // pred_region
          %s1773 = smul.u32 32, %s21
          %s1775 = ssub.s32 4096, 4096
          %1776 = vsyncadd %s1766, %s1775
          %s1777 = smul.addr %s1773, 128
          %s1778 = scalar_lea.hbm %s7, %s1777
          %s1779 = sshll.u32 %s1769, 4
          %s1780 = int_to_ptr.vmem [resolvable:$true] %s1779
          %1785 = dma.vmem_to_hbm [thread:$0]  %s1780, 4096, %s1778, %s1766, 128, 128, 8
        $region52: #{tpu_custom_call.1} parent=47 // pred_fallthru
          _
      $region48: #{tpu_custom_call.1} parent=5 // pred_fallthru
        _
      %p1786 = scmp.le.s32.totalorder 2, %s16
      // Predicated region
      $region53: #{tpu_custom_call.1} parent=5 // pred_check
        %p1787 = pneg %p1786
      $region54: #{tpu_custom_call.1} parent=5 // pred_check_branch
        %1789 = sbr.rel (%p1787) target = $region56
      $region55: #{tpu_custom_call.1} parent=5 // pred_region
        %s1790 = ssub.s32 %s16, 2
        // Predicated region
        $region57: #{tpu_custom_call.1} parent=55 // pred_check
          %p1791 = pneg %p197
        $region58: #{tpu_custom_call.1} parent=55 // pred_check_branch
          %1793 = sbr.rel (%p1791) target = $region60
        $region59: #{tpu_custom_call.1} parent=55 // pred_region
          %s1794 = sand.u32 %s182, 1
          %s1795 = scalar_lea.sflag [#allocation3], %s1794
          %s1796 = sand.u32 %s182, 1
          %s1797 = smul.addr %s1796, 256
          %s1798 = scalar_lea.vmem [#allocation2], %s1797
          %1799 = dma.done %s1795, 4096
        $region60: #{tpu_custom_call.1} parent=55 // pred_fallthru
          _
      $region56: #{tpu_custom_call.1} parent=5 // pred_fallthru
        _
    $region6: #{tpu_custom_call.1} parent=1 // loop_footer
      %s20 = sadd.s32 1, %s16
    $region7: #{tpu_custom_call.1} parent=1 // loop_footer_branch
      %15 = sbr.rel target = $region3
    $region8: #{tpu_custom_call.1} parent=1 // loop_exit
      _
    %1800 = vsyncpa [#allocation3], 1
    %s1801 = scalar_lea.sflag [#allocation3], 1
    %1802 = vsyncpa %s1801, 1

</llo_original>
